<compile_context>
chip_gen: v6e
topology: v6e:2x2x1
jax: 0.10.0
libtpu: 0.0.40
codegen_flags: <defaults>
</compile_context>

<pallas_src>
import functools

import jax
import jax.numpy as jnp
from jax.experimental import pallas as pl
from jax.experimental.pallas import tpu as pltpu


# ---------------- small helpers ----------------

def _nt(a, b):
    """a [M,K] x b [N,K] -> [M,N] (contract last dims of both; MXU 'NT' path)."""
    return jax.lax.dot_general(a, b, (((1,), (1,)), ((), ())),
                               preferred_element_type=jnp.float32)


def _vmem_limit_bytes():
    cap = 64 * 1024 * 1024
    try:
        cap = int(pltpu.get_tpu_info().vmem_capacity_bytes)
    except Exception:
        pass
    return min(cap * 3 // 4, 100 * 1024 * 1024)


def _full_spec(shape):
    nd = len(shape)
    return pl.BlockSpec(shape, lambda i, _nd=nd: (0,) * _nd)


# ---------------- the single fused kernel ----------------

def net_fused_kernel(x_ref, a_ref, oh_ref, oht_ref, k1_ref, k2_ref,
                     wrel1_ref, wroot1_ref, b1_ref, p1c_ref, p1r_ref,
                     wrel2_ref, wroot2_ref, b2_ref, p2c_ref, p2r_ref,
                     w1a_ref, w1b_ref, bl1_ref, w2_ref, bl2_ref,
                     out_ref, *, num_graphs):
    f32, bf16 = jnp.float32, jnp.bfloat16
    N = x_ref.shape[0]
    B = num_graphs
    neg = jnp.finfo(f32).min

    x = x_ref[...]
    x_bf = x.astype(bf16)
    a = a_ref[...]                                # [N,N] bf16
    oh = oh_ref[...]                              # [N,B] membership one-hot
    oht = oht_ref[...]                            # [B,N] transposed membership

    row_i = jax.lax.broadcasted_iota(jnp.int32, (N, N), 0)
    col_j = jax.lax.broadcasted_iota(jnp.int32, (N, N), 1)
    tie_lt = col_j < row_i                        # lower index wins on ties
    nonself = col_j != row_i                      # a node is never "better" than itself

    # ---- conv1 + relu: two bf16 MXU dots, no lane-dim concat ----
    agg1 = jnp.dot(a, x_bf, preferred_element_type=f32)                    # [N,F]
    h1 = jnp.maximum(
        jnp.dot(agg1.astype(bf16), wrel1_ref[...], preferred_element_type=f32)
        + jnp.dot(x_bf, wroot1_ref[...], preferred_element_type=f32)
        + b1_ref[...], 0.0)                                                 # [N,H]

    # ---- pool1: score + in-kernel per-graph top-k rank + tanh gate ----
    s1 = jnp.dot(h1, p1c_ref[...], preferred_element_type=f32)             # [N,1]
    s1_row = _nt(p1r_ref[...], h1)                                          # [1,N]
    same = _nt(oh, oh)                                                      # [N,N] 1.0 iff same graph
    better1 = nonself & ((s1_row > s1) | ((s1_row == s1) & tie_lt))
    rank1 = jnp.sum(jnp.where(better1, same, 0.0), axis=1, keepdims=True)   # [N,1]
    keep1 = (rank1 < k1_ref[...]).astype(f32)                               # [N,1]
    g1 = h1 * (jnp.tanh(s1) * keep1)                                        # dropped rows -> 0

    # ---- global max|mean pool 1 (mean via MXU; max via small static loop) ----
    cnt1 = jnp.dot(oht, keep1, preferred_element_type=f32)                  # [B,1]
    mean1 = jnp.dot(oht, g1, preferred_element_type=f32) / jnp.maximum(cnt1, 1.0)
    maxs = []
    for b in range(B):
        mb = oh[:, b:b + 1] * keep1
        maxs.append(jnp.max(jnp.where(mb > 0.0, g1, neg), axis=0, keepdims=True))
    max1 = jnp.where(cnt1 > 0.0, jnp.concatenate(maxs, axis=0), 0.0)        # [B,H]

    # ---- conv2 + relu (gated adjacency never materialized: A1@g == keep * (A@g)) ----
    g1_bf = g1.astype(bf16)
    agg2 = keep1 * jnp.dot(a, g1_bf, preferred_element_type=f32)            # [N,H]
    h2 = jnp.maximum(
        jnp.dot(agg2.astype(bf16), wrel2_ref[...], preferred_element_type=f32)
        + jnp.dot(g1_bf, wroot2_ref[...], preferred_element_type=f32)
        + b2_ref[...], 0.0)

    # ---- pool2 (valid candidates = nodes kept by pool1) ----
    s2 = jnp.dot(h2, p2c_ref[...], preferred_element_type=f32)
    s2_row = _nt(p2r_ref[...], h2)
    sv = _nt(oh, oh * keep1)                       # same graph AND column j still alive
    better2 = nonself & ((s2_row > s2) | ((s2_row == s2) & tie_lt))
    rank2 = jnp.sum(jnp.where(better2, sv, 0.0), axis=1, keepdims=True)
    keep2 = keep1 * (rank2 < k2_ref[...]).astype(f32)
    g2 = h2 * (jnp.tanh(s2) * keep2)

    cnt2 = jnp.dot(oht, keep2, preferred_element_type=f32)
    mean2 = jnp.dot(oht, g2, preferred_element_type=f32) / jnp.maximum(cnt2, 1.0)
    maxs2 = []
    for b in range(B):
        mb = oh[:, b:b + 1] * keep2
        maxs2.append(jnp.max(jnp.where(mb > 0.0, g2, neg), axis=0, keepdims=True))
    max2 = jnp.where(cnt2 > 0.0, jnp.concatenate(maxs2, axis=0), 0.0)

    # ---- head: (x1 + x2) -> lin1+relu -> (dropout=id) -> lin2 -> log_softmax ----
    smax = (max1 + max2).astype(bf16)
    smean = (mean1 + mean2).astype(bf16)
    hid = jnp.maximum(
        jnp.dot(smax, w1a_ref[...], preferred_element_type=f32)
        + jnp.dot(smean, w1b_ref[...], preferred_element_type=f32)
        + bl1_ref[...], 0.0)
    # TODO(synk): F.dropout is identity here (eval-mode forward, training=False).
    logits = jnp.dot(hid.astype(bf16), w2_ref[...],
                     preferred_element_type=f32) + bl2_ref[...]
    z = logits - jnp.max(logits, axis=-1, keepdims=True)
    out_ref[...] = z - jnp.log(jnp.sum(jnp.exp(z), axis=-1, keepdims=True))


# ---------------- host-side preprocessing (done ONCE, outside jit) ----------------

def init_params(key, num_features, hidden, num_classes):
    ks = jax.random.split(key, 10)
    s = 0.1
    p = {
        # GraphConv: lin_rel (bias) on aggregated neighbors, lin_root (no bias) on x
        "w_rel1": s * jax.random.normal(ks[0], (hidden, num_features)),
        "b_rel1": s * jax.random.normal(ks[1], (hidden,)),
        "w_root1": s * jax.random.normal(ks[2], (hidden, num_features)),
        "p1": s * jax.random.normal(ks[3], (hidden,)),      # TopKPooling weight
        "w_rel2": s * jax.random.normal(ks[4], (hidden, hidden)),
        "b_rel2": s * jax.random.normal(ks[5], (hidden,)),
        "w_root2": s * jax.random.normal(ks[6], (hidden, hidden)),
        "p2": s * jax.random.normal(ks[7], (hidden,)),
        "w_l1": s * jax.random.normal(ks[8], (hidden, 2 * hidden)),
        "b_l1": jnp.zeros((hidden,)),
        "w_l2": s * jax.random.normal(ks[9], (num_classes, hidden)),
        "b_l2": jnp.zeros((num_classes,)),
    }
    return {k: v.astype(jnp.float32) for k, v in p.items()}


def prepare_params(params):
    """Transpose / split / bf16-cast weights once, outside the jitted forward."""
    bf = jnp.bfloat16
    H = params["w_rel1"].shape[0]
    C = params["w_l2"].shape[0]
    p1 = params["p1"] / jnp.linalg.norm(params["p1"])
    p2 = params["p2"] / jnp.linalg.norm(params["p2"])
    w1t = params["w_l1"].T                                   # [2H, H]
    return dict(
        wrel1=params["w_rel1"].T.astype(bf), wroot1=params["w_root1"].T.astype(bf),
        b1=params["b_rel1"].reshape(1, H).astype(jnp.float32),
        p1c=p1.reshape(H, 1).astype(jnp.float32), p1r=p1.reshape(1, H).astype(jnp.float32),
        wrel2=params["w_rel2"].T.astype(bf), wroot2=params["w_root2"].T.astype(bf),
        b2=params["b_rel2"].reshape(1, H).astype(jnp.float32),
        p2c=p2.reshape(H, 1).astype(jnp.float32), p2r=p2.reshape(1, H).astype(jnp.float32),
        w1a=w1t[:H, :].astype(bf), w1b=w1t[H:, :].astype(bf),
        bl1=params["b_l1"].reshape(1, H).astype(jnp.float32),
        w2=params["w_l2"].T.astype(bf),
        bl2=params["b_l2"].reshape(1, C).astype(jnp.float32),
    )


def prepare_graph(batch, num_graphs, ratio=0.8):
    """Membership one-hots and per-node top-k budgets (depend only on batch)."""
    N = batch.shape[0]
    oh = (batch[:, None] == jnp.arange(num_graphs)[None, :]).astype(jnp.float32)
    n_g = jnp.sum(oh, axis=0)                    # nodes per graph
    k1_g = jnp.ceil(ratio * n_g)                 # kept after pool1
    k2_g = jnp.ceil(ratio * k1_g)                # kept after pool2
    return dict(
        oh=oh, oht=oh.T,
        k1=k1_g[batch].reshape(N, 1).astype(jnp.float32),
        k2=k2_g[batch].reshape(N, 1).astype(jnp.float32),
    )


# ---------------- jitted forward: ONE pallas_call ----------------

def net_forward(prep, graph, x, A_bf16):
    num_graphs = graph["oh"].shape[1]
    C = prep["bl2"].shape[1]
    args = (x, A_bf16, graph["oh"], graph["oht"], graph["k1"], graph["k2"],
            prep["wrel1"], prep["wroot1"], prep["b1"], prep["p1c"], prep["p1r"],
            prep["wrel2"], prep["wroot2"], prep["b2"], prep["p2c"], prep["p2r"],
            prep["w1a"], prep["w1b"], prep["bl1"], prep["w2"], prep["bl2"])
    return pl.pallas_call(
        functools.partial(net_fused_kernel, num_graphs=num_graphs),
        out_shape=jax.ShapeDtypeStruct((num_graphs, C), jnp.float32),
        grid=(1,),
        in_specs=[_full_spec(a.shape) for a in args],
        out_specs=_full_spec((num_graphs, C)),
        compiler_params=pltpu.CompilerParams(
            dimension_semantics=("arbitrary",),
            vmem_limit_bytes=_vmem_limit_bytes()),
    )(*args)


# ---------------- demo / self-test ----------------

if __name__ == "__main__":
    num_features, hidden, num_classes, dropout = 8, 32, 4, 0.5
    num_graphs, nodes_per_graph = 2, 8
    N = num_graphs * nodes_per_graph

    key = jax.random.PRNGKey(0)
    kx, kp = jax.random.split(key)

    # node features
    x = jax.random.normal(kx, (N, num_features), dtype=jnp.float32)

    # batch vector (graph id per node)
    batch = jnp.repeat(jnp.arange(num_graphs), nodes_per_graph)

    # bidirectional ring edges within each graph -> dense adjacency A[dst, src]
    src, dst = [], []
    for g in range(num_graphs):
        off = g * nodes_per_graph
        for i in range(nodes_per_graph):
            j = (i + 1) % nodes_per_graph
            src += [off + i, off + j]
            dst += [off + j, off + i]
    A = jnp.zeros((N, N), dtype=jnp.float32).at[
        jnp.array(dst), jnp.array(src)].add(1.0)

    params = init_params(kp, num_features, hidden, num_classes)

    # --- one-time host-side prep (hoisted out of the jitted forward) ---
    A_bf16 = A.astype(jnp.bfloat16)               # exact for small integer edge counts
    prep = prepare_params(params)
    graph = prepare_graph(batch, num_graphs, ratio=0.8)

    fwd = jax.jit(net_forward)
    out = fwd(prep, graph, x, A_bf16)
    out = jax.block_until_ready(out)

    assert out.shape == (num_graphs, num_classes)
    assert bool(jnp.all(jnp.isfinite(out)))
    # rows of log_softmax must exponentiate-sum to 1
    assert bool(jnp.allclose(jnp.sum(jnp.exp(out), axis=-1), 1.0, atol=1e-5))
    print("KERNEL_OK")
</pallas_src>

<mosaic_0001>
module attributes {stable_mosaic.version = 11 : i64} {
  func.func @net_fused_kernel(%arg0: i32, %arg1: memref<16x8xf32, #tpu.memory_space<vmem>>, %arg2: memref<16x16xbf16, #tpu.memory_space<vmem>>, %arg3: memref<16x2xf32, #tpu.memory_space<vmem>>, %arg4: memref<2x16xf32, #tpu.memory_space<vmem>>, %arg5: memref<16x1xf32, #tpu.memory_space<vmem>>, %arg6: memref<16x1xf32, #tpu.memory_space<vmem>>, %arg7: memref<8x32xbf16, #tpu.memory_space<vmem>>, %arg8: memref<8x32xbf16, #tpu.memory_space<vmem>>, %arg9: memref<1x32xf32, #tpu.memory_space<vmem>>, %arg10: memref<32x1xf32, #tpu.memory_space<vmem>>, %arg11: memref<1x32xf32, #tpu.memory_space<vmem>>, %arg12: memref<32x32xbf16, #tpu.memory_space<vmem>>, %arg13: memref<32x32xbf16, #tpu.memory_space<vmem>>, %arg14: memref<1x32xf32, #tpu.memory_space<vmem>>, %arg15: memref<32x1xf32, #tpu.memory_space<vmem>>, %arg16: memref<1x32xf32, #tpu.memory_space<vmem>>, %arg17: memref<32x32xbf16, #tpu.memory_space<vmem>>, %arg18: memref<32x32xbf16, #tpu.memory_space<vmem>>, %arg19: memref<1x32xf32, #tpu.memory_space<vmem>>, %arg20: memref<32x4xbf16, #tpu.memory_space<vmem>>, %arg21: memref<1x4xf32, #tpu.memory_space<vmem>>, %arg22: memref<2x4xf32, #tpu.memory_space<vmem>>) attributes {dimension_semantics = [#tpu.dimension_semantics<arbitrary>], iteration_bounds = array<i64: 1>, scalar_prefetch = 0 : i64, scratch_operands = 0 : i64, tpu.core_type = #tpu.core_type<tc>, window_params = [{pipeline_mode = #tpu.pipeline_mode<synchronous>, transform_indices = @transform_0, window_bounds = array<i64: 16, 8>}, {pipeline_mode = #tpu.pipeline_mode<synchronous>, transform_indices = @transform_1, window_bounds = array<i64: 16, 16>}, {pipeline_mode = #tpu.pipeline_mode<synchronous>, transform_indices = @transform_2, window_bounds = array<i64: 16, 2>}, {pipeline_mode = #tpu.pipeline_mode<synchronous>, transform_indices = @transform_3, window_bounds = array<i64: 2, 16>}, {pipeline_mode = #tpu.pipeline_mode<synchronous>, transform_indices = @transform_4, window_bounds = array<i64: 16, 1>}, {pipeline_mode = #tpu.pipeline_mode<synchronous>, transform_indices = @transform_5, window_bounds = array<i64: 16, 1>}, {pipeline_mode = #tpu.pipeline_mode<synchronous>, transform_indices = @transform_6, window_bounds = array<i64: 8, 32>}, {pipeline_mode = #tpu.pipeline_mode<synchronous>, transform_indices = @transform_7, window_bounds = array<i64: 8, 32>}, {pipeline_mode = #tpu.pipeline_mode<synchronous>, transform_indices = @transform_8, window_bounds = array<i64: 1, 32>}, {pipeline_mode = #tpu.pipeline_mode<synchronous>, transform_indices = @transform_9, window_bounds = array<i64: 32, 1>}, {pipeline_mode = #tpu.pipeline_mode<synchronous>, transform_indices = @transform_10, window_bounds = array<i64: 1, 32>}, {pipeline_mode = #tpu.pipeline_mode<synchronous>, transform_indices = @transform_11, window_bounds = array<i64: 32, 32>}, {pipeline_mode = #tpu.pipeline_mode<synchronous>, transform_indices = @transform_12, window_bounds = array<i64: 32, 32>}, {pipeline_mode = #tpu.pipeline_mode<synchronous>, transform_indices = @transform_13, window_bounds = array<i64: 1, 32>}, {pipeline_mode = #tpu.pipeline_mode<synchronous>, transform_indices = @transform_14, window_bounds = array<i64: 32, 1>}, {pipeline_mode = #tpu.pipeline_mode<synchronous>, transform_indices = @transform_15, window_bounds = array<i64: 1, 32>}, {pipeline_mode = #tpu.pipeline_mode<synchronous>, transform_indices = @transform_16, window_bounds = array<i64: 32, 32>}, {pipeline_mode = #tpu.pipeline_mode<synchronous>, transform_indices = @transform_17, window_bounds = array<i64: 32, 32>}, {pipeline_mode = #tpu.pipeline_mode<synchronous>, transform_indices = @transform_18, window_bounds = array<i64: 1, 32>}, {pipeline_mode = #tpu.pipeline_mode<synchronous>, transform_indices = @transform_19, window_bounds = array<i64: 32, 4>}, {pipeline_mode = #tpu.pipeline_mode<synchronous>, transform_indices = @transform_20, window_bounds = array<i64: 1, 4>}, {pipeline_mode = #tpu.pipeline_mode<synchronous>, transform_indices = @transform_21, window_bounds = array<i64: 2, 4>}]} {
    %c0 = arith.constant 0 : index
    %c0_0 = arith.constant 0 : index
    %0 = vector.load %arg1[%c0, %c0_0] : memref<16x8xf32, #tpu.memory_space<vmem>>, vector<16x8xf32>
    %1 = arith.truncf %0 : vector<16x8xf32> to vector<16x8xbf16>
    %c0_1 = arith.constant 0 : index
    %c0_2 = arith.constant 0 : index
    %2 = vector.load %arg2[%c0_1, %c0_2] : memref<16x16xbf16, #tpu.memory_space<vmem>>, vector<16x16xbf16>
    %c0_3 = arith.constant 0 : index
    %c0_4 = arith.constant 0 : index
    %3 = vector.load %arg3[%c0_3, %c0_4] : memref<16x2xf32, #tpu.memory_space<vmem>>, vector<16x2xf32>
    %c0_5 = arith.constant 0 : index
    %c0_6 = arith.constant 0 : index
    %4 = vector.load %arg4[%c0_5, %c0_6] : memref<2x16xf32, #tpu.memory_space<vmem>>, vector<2x16xf32>
    %5 = tpu.iota {dimensions = array<i32: 0>} : vector<16x16xi32>
    %6 = tpu.iota {dimensions = array<i32: 1>} : vector<16x16xi32>
    %7 = arith.cmpi slt, %6, %5 : vector<16x16xi32>
    %8 = arith.cmpi ne, %6, %5 : vector<16x16xi32>
    %cst = arith.constant dense<0.000000e+00> : vector<16x8xf32>
    %9 = tpu.matmul %2, %1, %cst {dimension_numbers = #tpu.dot_dimension_numbers<[1], [0], [0], [1], [0, 0, 1, 1], [], []>} : vector<16x16xbf16>, vector<16x8xbf16>, vector<16x8xf32> -> vector<16x8xf32>
    %10 = arith.truncf %9 : vector<16x8xf32> to vector<16x8xbf16>
    %c0_7 = arith.constant 0 : index
    %c0_8 = arith.constant 0 : index
    %11 = vector.load %arg7[%c0_7, %c0_8] : memref<8x32xbf16, #tpu.memory_space<vmem>>, vector<8x32xbf16>
    %cst_9 = arith.constant dense<0.000000e+00> : vector<16x32xf32>
    %12 = tpu.matmul %10, %11, %cst_9 {dimension_numbers = #tpu.dot_dimension_numbers<[1], [0], [0], [1], [0, 0, 1, 1], [], []>} : vector<16x8xbf16>, vector<8x32xbf16>, vector<16x32xf32> -> vector<16x32xf32>
    %c0_10 = arith.constant 0 : index
    %c0_11 = arith.constant 0 : index
    %13 = vector.load %arg8[%c0_10, %c0_11] : memref<8x32xbf16, #tpu.memory_space<vmem>>, vector<8x32xbf16>
    %cst_12 = arith.constant dense<0.000000e+00> : vector<16x32xf32>
    %14 = tpu.matmul %1, %13, %cst_12 {dimension_numbers = #tpu.dot_dimension_numbers<[1], [0], [0], [1], [0, 0, 1, 1], [], []>} : vector<16x8xbf16>, vector<8x32xbf16>, vector<16x32xf32> -> vector<16x32xf32>
    %15 = arith.addf %12, %14 : vector<16x32xf32>
    %c0_13 = arith.constant 0 : index
    %c0_14 = arith.constant 0 : index
    %16 = vector.load %arg9[%c0_13, %c0_14] : memref<1x32xf32, #tpu.memory_space<vmem>>, vector<1x32xf32>
    %17 = vector.broadcast %16 : vector<1x32xf32> to vector<16x32xf32>
    %18 = arith.addf %15, %17 : vector<16x32xf32>
    %cst_15 = arith.constant 0.000000e+00 : f32
    %19 = vector.broadcast %cst_15 : f32 to vector<16x32xf32>
    %20 = arith.maximumf %18, %19 : vector<16x32xf32>
    %c0_16 = arith.constant 0 : index
    %c0_17 = arith.constant 0 : index
    %21 = vector.load %arg10[%c0_16, %c0_17] : memref<32x1xf32, #tpu.memory_space<vmem>>, vector<32x1xf32>
    %cst_18 = arith.constant dense<0.000000e+00> : vector<16x1xf32>
    %22 = tpu.matmul %20, %21, %cst_18 {dimension_numbers = #tpu.dot_dimension_numbers<[1], [0], [0], [1], [0, 0, 1, 1], [], []>} : vector<16x32xf32>, vector<32x1xf32>, vector<16x1xf32> -> vector<16x1xf32>
    %c0_19 = arith.constant 0 : index
    %c0_20 = arith.constant 0 : index
    %23 = vector.load %arg11[%c0_19, %c0_20] : memref<1x32xf32, #tpu.memory_space<vmem>>, vector<1x32xf32>
    %cst_21 = arith.constant dense<0.000000e+00> : vector<1x16xf32>
    %24 = tpu.matmul %23, %20, %cst_21 {dimension_numbers = #tpu.dot_dimension_numbers<[1], [1], [0], [0], [0, 0, 1, 0], [], []>} : vector<1x32xf32>, vector<16x32xf32>, vector<1x16xf32> -> vector<1x16xf32>
    %cst_22 = arith.constant dense<0.000000e+00> : vector<16x16xf32>
    %25 = tpu.matmul %3, %3, %cst_22 {dimension_numbers = #tpu.dot_dimension_numbers<[1], [1], [0], [0], [0, 0, 1, 0], [], []>} : vector<16x2xf32>, vector<16x2xf32>, vector<16x16xf32> -> vector<16x16xf32>
    %26 = vector.broadcast %24 : vector<1x16xf32> to vector<16x16xf32>
    %27 = vector.broadcast %22 : vector<16x1xf32> to vector<16x16xf32>
    %28 = arith.cmpf ogt, %26, %27 : vector<16x16xf32>
    %29 = vector.broadcast %24 : vector<1x16xf32> to vector<16x16xf32>
    %30 = vector.broadcast %22 : vector<16x1xf32> to vector<16x16xf32>
    %31 = arith.cmpf oeq, %29, %30 : vector<16x16xf32>
    %32 = arith.andi %31, %7 : vector<16x16xi1>
    %33 = arith.ori %28, %32 : vector<16x16xi1>
    %34 = arith.andi %8, %33 : vector<16x16xi1>
    %cst_23 = arith.constant 0.000000e+00 : f32
    %35 = vector.broadcast %cst_23 : f32 to vector<16x16xf32>
    %36 = arith.select %34, %25, %35 : vector<16x16xi1>, vector<16x16xf32>
    %cst_24 = arith.constant dense<0.000000e+00> : vector<16xf32>
    %37 = vector.multi_reduction <add>, %36, %cst_24 [1] : vector<16x16xf32> to vector<16xf32>
    %38 = vector.shape_cast %37 : vector<16xf32> to vector<16x1xf32>
    %c0_25 = arith.constant 0 : index
    %c0_26 = arith.constant 0 : index
    %39 = vector.load %arg5[%c0_25, %c0_26] : memref<16x1xf32, #tpu.memory_space<vmem>>, vector<16x1xf32>
    %40 = arith.cmpf olt, %38, %39 : vector<16x1xf32>
    %41 = arith.extui %40 : vector<16x1xi1> to vector<16x1xi32>
    %42 = arith.sitofp %41 : vector<16x1xi32> to vector<16x1xf32>
    %43 = math.tanh %22 : vector<16x1xf32>
    %44 = arith.mulf %43, %42 : vector<16x1xf32>
    %45 = vector.broadcast %44 : vector<16x1xf32> to vector<16x32xf32>
    %46 = arith.mulf %20, %45 : vector<16x32xf32>
    %cst_27 = arith.constant dense<0.000000e+00> : vector<2x1xf32>
    %47 = tpu.matmul %4, %42, %cst_27 {dimension_numbers = #tpu.dot_dimension_numbers<[1], [0], [0], [1], [0, 0, 1, 1], [], []>} : vector<2x16xf32>, vector<16x1xf32>, vector<2x1xf32> -> vector<2x1xf32>
    %cst_28 = arith.constant dense<0.000000e+00> : vector<2x32xf32>
    %48 = tpu.matmul %4, %46, %cst_28 {dimension_numbers = #tpu.dot_dimension_numbers<[1], [0], [0], [1], [0, 0, 1, 1], [], []>} : vector<2x16xf32>, vector<16x32xf32>, vector<2x32xf32> -> vector<2x32xf32>
    %cst_29 = arith.constant 1.000000e+00 : f32
    %49 = vector.broadcast %cst_29 : f32 to vector<2x1xf32>
    %50 = arith.maximumf %47, %49 : vector<2x1xf32>
    %51 = vector.broadcast %50 : vector<2x1xf32> to vector<2x32xf32>
    %52 = arith.divf %48, %51 : vector<2x32xf32>
    %53 = vector.extract_strided_slice %3 {offsets = [0, 0], sizes = [16, 1], strides = [1, 1]} : vector<16x2xf32> to vector<16x1xf32>
    %54 = arith.mulf %53, %42 : vector<16x1xf32>
    %cst_30 = arith.constant 0.000000e+00 : f32
    %55 = vector.broadcast %cst_30 : f32 to vector<16x1xf32>
    %56 = arith.cmpf ogt, %54, %55 : vector<16x1xf32>
    %cst_31 = arith.constant -3.40282347E+38 : f32
    %57 = vector.shape_cast %56 : vector<16x1xi1> to vector<16x1xi1>
    %58 = vector.broadcast %57 : vector<16x1xi1> to vector<16x32xi1>
    %59 = vector.broadcast %cst_31 : f32 to vector<16x32xf32>
    %60 = arith.select %58, %46, %59 : vector<16x32xi1>, vector<16x32xf32>
    %cst_32 = arith.constant dense<0xFF800000> : vector<32xf32>
    %61 = vector.multi_reduction <maximumf>, %60, %cst_32 [0] : vector<16x32xf32> to vector<32xf32>
    %62 = vector.shape_cast %61 : vector<32xf32> to vector<1x32xf32>
    %63 = vector.extract_strided_slice %3 {offsets = [0, 1], sizes = [16, 1], strides = [1, 1]} : vector<16x2xf32> to vector<16x1xf32>
    %64 = arith.mulf %63, %42 : vector<16x1xf32>
    %cst_33 = arith.constant 0.000000e+00 : f32
    %65 = vector.broadcast %cst_33 : f32 to vector<16x1xf32>
    %66 = arith.cmpf ogt, %64, %65 : vector<16x1xf32>
    %cst_34 = arith.constant -3.40282347E+38 : f32
    %67 = vector.shape_cast %66 : vector<16x1xi1> to vector<16x1xi1>
    %68 = vector.broadcast %67 : vector<16x1xi1> to vector<16x32xi1>
    %69 = vector.broadcast %cst_34 : f32 to vector<16x32xf32>
    %70 = arith.select %68, %46, %69 : vector<16x32xi1>, vector<16x32xf32>
    %cst_35 = arith.constant dense<0xFF800000> : vector<32xf32>
    %71 = vector.multi_reduction <maximumf>, %70, %cst_35 [0] : vector<16x32xf32> to vector<32xf32>
    %72 = vector.shape_cast %71 : vector<32xf32> to vector<1x32xf32>
    %cst_36 = arith.constant 0.000000e+00 : f32
    %73 = vector.broadcast %cst_36 : f32 to vector<2x1xf32>
    %74 = arith.cmpf ogt, %47, %73 : vector<2x1xf32>
    %75 = tpu.concatenate %62, %72 in 0 : vector<1x32xf32>, vector<1x32xf32> -> vector<2x32xf32>
    %cst_37 = arith.constant 0.000000e+00 : f32
    %76 = vector.shape_cast %74 : vector<2x1xi1> to vector<2x1xi1>
    %77 = vector.broadcast %76 : vector<2x1xi1> to vector<2x32xi1>
    %78 = vector.broadcast %cst_37 : f32 to vector<2x32xf32>
    %79 = arith.select %77, %75, %78 : vector<2x32xi1>, vector<2x32xf32>
    %80 = arith.truncf %46 : vector<16x32xf32> to vector<16x32xbf16>
    %cst_38 = arith.constant dense<0.000000e+00> : vector<16x32xf32>
    %81 = tpu.matmul %2, %80, %cst_38 {dimension_numbers = #tpu.dot_dimension_numbers<[1], [0], [0], [1], [0, 0, 1, 1], [], []>} : vector<16x16xbf16>, vector<16x32xbf16>, vector<16x32xf32> -> vector<16x32xf32>
    %82 = vector.broadcast %42 : vector<16x1xf32> to vector<16x32xf32>
    %83 = arith.mulf %82, %81 : vector<16x32xf32>
    %84 = arith.truncf %83 : vector<16x32xf32> to vector<16x32xbf16>
    %c0_39 = arith.constant 0 : index
    %c0_40 = arith.constant 0 : index
    %85 = vector.load %arg12[%c0_39, %c0_40] : memref<32x32xbf16, #tpu.memory_space<vmem>>, vector<32x32xbf16>
    %cst_41 = arith.constant dense<0.000000e+00> : vector<16x32xf32>
    %86 = tpu.matmul %84, %85, %cst_41 {dimension_numbers = #tpu.dot_dimension_numbers<[1], [0], [0], [1], [0, 0, 1, 1], [], []>} : vector<16x32xbf16>, vector<32x32xbf16>, vector<16x32xf32> -> vector<16x32xf32>
    %c0_42 = arith.constant 0 : index
    %c0_43 = arith.constant 0 : index
    %87 = vector.load %arg13[%c0_42, %c0_43] : memref<32x32xbf16, #tpu.memory_space<vmem>>, vector<32x32xbf16>
    %cst_44 = arith.constant dense<0.000000e+00> : vector<16x32xf32>
    %88 = tpu.matmul %80, %87, %cst_44 {dimension_numbers = #tpu.dot_dimension_numbers<[1], [0], [0], [1], [0, 0, 1, 1], [], []>} : vector<16x32xbf16>, vector<32x32xbf16>, vector<16x32xf32> -> vector<16x32xf32>
    %89 = arith.addf %86, %88 : vector<16x32xf32>
    %c0_45 = arith.constant 0 : index
    %c0_46 = arith.constant 0 : index
    %90 = vector.load %arg14[%c0_45, %c0_46] : memref<1x32xf32, #tpu.memory_space<vmem>>, vector<1x32xf32>
    %91 = vector.broadcast %90 : vector<1x32xf32> to vector<16x32xf32>
    %92 = arith.addf %89, %91 : vector<16x32xf32>
    %cst_47 = arith.constant 0.000000e+00 : f32
    %93 = vector.broadcast %cst_47 : f32 to vector<16x32xf32>
    %94 = arith.maximumf %92, %93 : vector<16x32xf32>
    %c0_48 = arith.constant 0 : index
    %c0_49 = arith.constant 0 : index
    %95 = vector.load %arg15[%c0_48, %c0_49] : memref<32x1xf32, #tpu.memory_space<vmem>>, vector<32x1xf32>
    %cst_50 = arith.constant dense<0.000000e+00> : vector<16x1xf32>
    %96 = tpu.matmul %94, %95, %cst_50 {dimension_numbers = #tpu.dot_dimension_numbers<[1], [0], [0], [1], [0, 0, 1, 1], [], []>} : vector<16x32xf32>, vector<32x1xf32>, vector<16x1xf32> -> vector<16x1xf32>
    %c0_51 = arith.constant 0 : index
    %c0_52 = arith.constant 0 : index
    %97 = vector.load %arg16[%c0_51, %c0_52] : memref<1x32xf32, #tpu.memory_space<vmem>>, vector<1x32xf32>
    %cst_53 = arith.constant dense<0.000000e+00> : vector<1x16xf32>
    %98 = tpu.matmul %97, %94, %cst_53 {dimension_numbers = #tpu.dot_dimension_numbers<[1], [1], [0], [0], [0, 0, 1, 0], [], []>} : vector<1x32xf32>, vector<16x32xf32>, vector<1x16xf32> -> vector<1x16xf32>
    %99 = vector.broadcast %42 : vector<16x1xf32> to vector<16x2xf32>
    %100 = arith.mulf %3, %99 : vector<16x2xf32>
    %cst_54 = arith.constant dense<0.000000e+00> : vector<16x16xf32>
    %101 = tpu.matmul %3, %100, %cst_54 {dimension_numbers = #tpu.dot_dimension_numbers<[1], [1], [0], [0], [0, 0, 1, 0], [], []>} : vector<16x2xf32>, vector<16x2xf32>, vector<16x16xf32> -> vector<16x16xf32>
    %102 = vector.broadcast %98 : vector<1x16xf32> to vector<16x16xf32>
    %103 = vector.broadcast %96 : vector<16x1xf32> to vector<16x16xf32>
    %104 = arith.cmpf ogt, %102, %103 : vector<16x16xf32>
    %105 = vector.broadcast %98 : vector<1x16xf32> to vector<16x16xf32>
    %106 = vector.broadcast %96 : vector<16x1xf32> to vector<16x16xf32>
    %107 = arith.cmpf oeq, %105, %106 : vector<16x16xf32>
    %108 = arith.andi %107, %7 : vector<16x16xi1>
    %109 = arith.ori %104, %108 : vector<16x16xi1>
    %110 = arith.andi %8, %109 : vector<16x16xi1>
    %cst_55 = arith.constant 0.000000e+00 : f32
    %111 = vector.broadcast %cst_55 : f32 to vector<16x16xf32>
    %112 = arith.select %110, %101, %111 : vector<16x16xi1>, vector<16x16xf32>
    %cst_56 = arith.constant dense<0.000000e+00> : vector<16xf32>
    %113 = vector.multi_reduction <add>, %112, %cst_56 [1] : vector<16x16xf32> to vector<16xf32>
    %114 = vector.shape_cast %113 : vector<16xf32> to vector<16x1xf32>
    %c0_57 = arith.constant 0 : index
    %c0_58 = arith.constant 0 : index
    %115 = vector.load %arg6[%c0_57, %c0_58] : memref<16x1xf32, #tpu.memory_space<vmem>>, vector<16x1xf32>
    %116 = arith.cmpf olt, %114, %115 : vector<16x1xf32>
    %117 = arith.extui %116 : vector<16x1xi1> to vector<16x1xi32>
    %118 = arith.sitofp %117 : vector<16x1xi32> to vector<16x1xf32>
    %119 = arith.mulf %42, %118 : vector<16x1xf32>
    %120 = math.tanh %96 : vector<16x1xf32>
    %121 = arith.mulf %120, %119 : vector<16x1xf32>
    %122 = vector.broadcast %121 : vector<16x1xf32> to vector<16x32xf32>
    %123 = arith.mulf %94, %122 : vector<16x32xf32>
    %cst_59 = arith.constant dense<0.000000e+00> : vector<2x1xf32>
    %124 = tpu.matmul %4, %119, %cst_59 {dimension_numbers = #tpu.dot_dimension_numbers<[1], [0], [0], [1], [0, 0, 1, 1], [], []>} : vector<2x16xf32>, vector<16x1xf32>, vector<2x1xf32> -> vector<2x1xf32>
    %cst_60 = arith.constant dense<0.000000e+00> : vector<2x32xf32>
    %125 = tpu.matmul %4, %123, %cst_60 {dimension_numbers = #tpu.dot_dimension_numbers<[1], [0], [0], [1], [0, 0, 1, 1], [], []>} : vector<2x16xf32>, vector<16x32xf32>, vector<2x32xf32> -> vector<2x32xf32>
    %cst_61 = arith.constant 1.000000e+00 : f32
    %126 = vector.broadcast %cst_61 : f32 to vector<2x1xf32>
    %127 = arith.maximumf %124, %126 : vector<2x1xf32>
    %128 = vector.broadcast %127 : vector<2x1xf32> to vector<2x32xf32>
    %129 = arith.divf %125, %128 : vector<2x32xf32>
    %130 = vector.extract_strided_slice %3 {offsets = [0, 0], sizes = [16, 1], strides = [1, 1]} : vector<16x2xf32> to vector<16x1xf32>
    %131 = arith.mulf %130, %119 : vector<16x1xf32>
    %cst_62 = arith.constant 0.000000e+00 : f32
    %132 = vector.broadcast %cst_62 : f32 to vector<16x1xf32>
    %133 = arith.cmpf ogt, %131, %132 : vector<16x1xf32>
    %cst_63 = arith.constant -3.40282347E+38 : f32
    %134 = vector.shape_cast %133 : vector<16x1xi1> to vector<16x1xi1>
    %135 = vector.broadcast %134 : vector<16x1xi1> to vector<16x32xi1>
    %136 = vector.broadcast %cst_63 : f32 to vector<16x32xf32>
    %137 = arith.select %135, %123, %136 : vector<16x32xi1>, vector<16x32xf32>
    %cst_64 = arith.constant dense<0xFF800000> : vector<32xf32>
    %138 = vector.multi_reduction <maximumf>, %137, %cst_64 [0] : vector<16x32xf32> to vector<32xf32>
    %139 = vector.shape_cast %138 : vector<32xf32> to vector<1x32xf32>
    %140 = vector.extract_strided_slice %3 {offsets = [0, 1], sizes = [16, 1], strides = [1, 1]} : vector<16x2xf32> to vector<16x1xf32>
    %141 = arith.mulf %140, %119 : vector<16x1xf32>
    %cst_65 = arith.constant 0.000000e+00 : f32
    %142 = vector.broadcast %cst_65 : f32 to vector<16x1xf32>
    %143 = arith.cmpf ogt, %141, %142 : vector<16x1xf32>
    %cst_66 = arith.constant -3.40282347E+38 : f32
    %144 = vector.shape_cast %143 : vector<16x1xi1> to vector<16x1xi1>
    %145 = vector.broadcast %144 : vector<16x1xi1> to vector<16x32xi1>
    %146 = vector.broadcast %cst_66 : f32 to vector<16x32xf32>
    %147 = arith.select %145, %123, %146 : vector<16x32xi1>, vector<16x32xf32>
    %cst_67 = arith.constant dense<0xFF800000> : vector<32xf32>
    %148 = vector.multi_reduction <maximumf>, %147, %cst_67 [0] : vector<16x32xf32> to vector<32xf32>
    %149 = vector.shape_cast %148 : vector<32xf32> to vector<1x32xf32>
    %cst_68 = arith.constant 0.000000e+00 : f32
    %150 = vector.broadcast %cst_68 : f32 to vector<2x1xf32>
    %151 = arith.cmpf ogt, %124, %150 : vector<2x1xf32>
    %152 = tpu.concatenate %139, %149 in 0 : vector<1x32xf32>, vector<1x32xf32> -> vector<2x32xf32>
    %cst_69 = arith.constant 0.000000e+00 : f32
    %153 = vector.shape_cast %151 : vector<2x1xi1> to vector<2x1xi1>
    %154 = vector.broadcast %153 : vector<2x1xi1> to vector<2x32xi1>
    %155 = vector.broadcast %cst_69 : f32 to vector<2x32xf32>
    %156 = arith.select %154, %152, %155 : vector<2x32xi1>, vector<2x32xf32>
    %157 = arith.addf %79, %156 : vector<2x32xf32>
    %158 = arith.truncf %157 : vector<2x32xf32> to vector<2x32xbf16>
    %159 = arith.addf %52, %129 : vector<2x32xf32>
    %160 = arith.truncf %159 : vector<2x32xf32> to vector<2x32xbf16>
    %c0_70 = arith.constant 0 : index
    %c0_71 = arith.constant 0 : index
    %161 = vector.load %arg17[%c0_70, %c0_71] : memref<32x32xbf16, #tpu.memory_space<vmem>>, vector<32x32xbf16>
    %cst_72 = arith.constant dense<0.000000e+00> : vector<2x32xf32>
    %162 = tpu.matmul %158, %161, %cst_72 {dimension_numbers = #tpu.dot_dimension_numbers<[1], [0], [0], [1], [0, 0, 1, 1], [], []>} : vector<2x32xbf16>, vector<32x32xbf16>, vector<2x32xf32> -> vector<2x32xf32>
    %c0_73 = arith.constant 0 : index
    %c0_74 = arith.constant 0 : index
    %163 = vector.load %arg18[%c0_73, %c0_74] : memref<32x32xbf16, #tpu.memory_space<vmem>>, vector<32x32xbf16>
    %cst_75 = arith.constant dense<0.000000e+00> : vector<2x32xf32>
    %164 = tpu.matmul %160, %163, %cst_75 {dimension_numbers = #tpu.dot_dimension_numbers<[1], [0], [0], [1], [0, 0, 1, 1], [], []>} : vector<2x32xbf16>, vector<32x32xbf16>, vector<2x32xf32> -> vector<2x32xf32>
    %165 = arith.addf %162, %164 : vector<2x32xf32>
    %c0_76 = arith.constant 0 : index
    %c0_77 = arith.constant 0 : index
    %166 = vector.load %arg19[%c0_76, %c0_77] : memref<1x32xf32, #tpu.memory_space<vmem>>, vector<1x32xf32>
    %167 = vector.broadcast %166 : vector<1x32xf32> to vector<2x32xf32>
    %168 = arith.addf %165, %167 : vector<2x32xf32>
    %cst_78 = arith.constant 0.000000e+00 : f32
    %169 = vector.broadcast %cst_78 : f32 to vector<2x32xf32>
    %170 = arith.maximumf %168, %169 : vector<2x32xf32>
    %171 = arith.truncf %170 : vector<2x32xf32> to vector<2x32xbf16>
    %c0_79 = arith.constant 0 : index
    %c0_80 = arith.constant 0 : index
    %172 = vector.load %arg20[%c0_79, %c0_80] : memref<32x4xbf16, #tpu.memory_space<vmem>>, vector<32x4xbf16>
    %cst_81 = arith.constant dense<0.000000e+00> : vector<2x4xf32>
    %173 = tpu.matmul %171, %172, %cst_81 {dimension_numbers = #tpu.dot_dimension_numbers<[1], [0], [0], [1], [0, 0, 1, 1], [], []>} : vector<2x32xbf16>, vector<32x4xbf16>, vector<2x4xf32> -> vector<2x4xf32>
    %c0_82 = arith.constant 0 : index
    %c0_83 = arith.constant 0 : index
    %174 = vector.load %arg21[%c0_82, %c0_83] : memref<1x4xf32, #tpu.memory_space<vmem>>, vector<1x4xf32>
    %175 = vector.broadcast %174 : vector<1x4xf32> to vector<2x4xf32>
    %176 = arith.addf %173, %175 : vector<2x4xf32>
    %cst_84 = arith.constant dense<0xFF800000> : vector<2xf32>
    %177 = vector.multi_reduction <maximumf>, %176, %cst_84 [1] : vector<2x4xf32> to vector<2xf32>
    %178 = vector.shape_cast %177 : vector<2xf32> to vector<2x1xf32>
    %179 = vector.broadcast %178 : vector<2x1xf32> to vector<2x4xf32>
    %180 = arith.subf %176, %179 : vector<2x4xf32>
    %181 = math.exp %180 : vector<2x4xf32>
    %cst_85 = arith.constant dense<0.000000e+00> : vector<2xf32>
    %182 = vector.multi_reduction <add>, %181, %cst_85 [1] : vector<2x4xf32> to vector<2xf32>
    %183 = vector.shape_cast %182 : vector<2xf32> to vector<2x1xf32>
    %184 = math.log %183 : vector<2x1xf32>
    %185 = vector.broadcast %184 : vector<2x1xf32> to vector<2x4xf32>
    %186 = arith.subf %180, %185 : vector<2x4xf32>
    %c0_86 = arith.constant 0 : index
    %c0_87 = arith.constant 0 : index
    %187 = vector.load %arg22[%c0_86, %c0_87] : memref<2x4xf32, #tpu.memory_space<vmem>>, vector<2x4xf32>
    tpu.vector_store %arg22[%c0_86, %c0_87], %186 {strides = array<i32>} : memref<2x4xf32, #tpu.memory_space<vmem>>, vector<2x4xf32>,
    return
  }
  func.func @transform_0(%arg0: i32) -> (i32, i32) {
    %c0_i32 = arith.constant 0 : i32
    %c0_i32_0 = arith.constant 0 : i32
    %c0_i32_1 = arith.constant 0 : i32
    return %c0_i32, %c0_i32_0 : i32, i32
  }
  func.func @transform_1(%arg0: i32) -> (i32, i32) {
    %c0_i32 = arith.constant 0 : i32
    %c0_i32_0 = arith.constant 0 : i32
    %c0_i32_1 = arith.constant 0 : i32
    return %c0_i32, %c0_i32_0 : i32, i32
  }
  func.func @transform_2(%arg0: i32) -> (i32, i32) {
    %c0_i32 = arith.constant 0 : i32
    %c0_i32_0 = arith.constant 0 : i32
    %c0_i32_1 = arith.constant 0 : i32
    return %c0_i32, %c0_i32_0 : i32, i32
  }
  func.func @transform_3(%arg0: i32) -> (i32, i32) {
    %c0_i32 = arith.constant 0 : i32
    %c0_i32_0 = arith.constant 0 : i32
    %c0_i32_1 = arith.constant 0 : i32
    return %c0_i32, %c0_i32_0 : i32, i32
  }
  func.func @transform_4(%arg0: i32) -> (i32, i32) {
    %c0_i32 = arith.constant 0 : i32
    %c0_i32_0 = arith.constant 0 : i32
    %c0_i32_1 = arith.constant 0 : i32
    return %c0_i32, %c0_i32_0 : i32, i32
  }
  func.func @transform_5(%arg0: i32) -> (i32, i32) {
    %c0_i32 = arith.constant 0 : i32
    %c0_i32_0 = arith.constant 0 : i32
    %c0_i32_1 = arith.constant 0 : i32
    return %c0_i32, %c0_i32_0 : i32, i32
  }
  func.func @transform_6(%arg0: i32) -> (i32, i32) {
    %c0_i32 = arith.constant 0 : i32
    %c0_i32_0 = arith.constant 0 : i32
    %c0_i32_1 = arith.constant 0 : i32
    return %c0_i32, %c0_i32_0 : i32, i32
  }
  func.func @transform_7(%arg0: i32) -> (i32, i32) {
    %c0_i32 = arith.constant 0 : i32
    %c0_i32_0 = arith.constant 0 : i32
    %c0_i32_1 = arith.constant 0 : i32
    return %c0_i32, %c0_i32_0 : i32, i32
  }
  func.func @transform_8(%arg0: i32) -> (i32, i32) {
    %c0_i32 = arith.constant 0 : i32
    %c0_i32_0 = arith.constant 0 : i32
    %c0_i32_1 = arith.constant 0 : i32
    return %c0_i32, %c0_i32_0 : i32, i32
  }
  func.func @transform_9(%arg0: i32) -> (i32, i32) {
    %c0_i32 = arith.constant 0 : i32
    %c0_i32_0 = arith.constant 0 : i32
    %c0_i32_1 = arith.constant 0 : i32
    return %c0_i32, %c0_i32_0 : i32, i32
  }
  func.func @transform_10(%arg0: i32) -> (i32, i32) {
    %c0_i32 = arith.constant 0 : i32
    %c0_i32_0 = arith.constant 0 : i32
    %c0_i32_1 = arith.constant 0 : i32
    return %c0_i32, %c0_i32_0 : i32, i32
  }
  func.func @transform_11(%arg0: i32) -> (i32, i32) {
    %c0_i32 = arith.constant 0 : i32
    %c0_i32_0 = arith.constant 0 : i32
    %c0_i32_1 = arith.constant 0 : i32
    return %c0_i32, %c0_i32_0 : i32, i32
  }
  func.func @transform_12(%arg0: i32) -> (i32, i32) {
    %c0_i32 = arith.constant 0 : i32
    %c0_i32_0 = arith.constant 0 : i32
    %c0_i32_1 = arith.constant 0 : i32
    return %c0_i32, %c0_i32_0 : i32, i32
  }
  func.func @transform_13(%arg0: i32) -> (i32, i32) {
    %c0_i32 = arith.constant 0 : i32
    %c0_i32_0 = arith.constant 0 : i32
    %c0_i32_1 = arith.constant 0 : i32
    return %c0_i32, %c0_i32_0 : i32, i32
  }
  func.func @transform_14(%arg0: i32) -> (i32, i32) {
    %c0_i32 = arith.constant 0 : i32
    %c0_i32_0 = arith.constant 0 : i32
    %c0_i32_1 = arith.constant 0 : i32
    return %c0_i32, %c0_i32_0 : i32, i32
  }
  func.func @transform_15(%arg0: i32) -> (i32, i32) {
    %c0_i32 = arith.constant 0 : i32
    %c0_i32_0 = arith.constant 0 : i32
    %c0_i32_1 = arith.constant 0 : i32
    return %c0_i32, %c0_i32_0 : i32, i32
  }
  func.func @transform_16(%arg0: i32) -> (i32, i32) {
    %c0_i32 = arith.constant 0 : i32
    %c0_i32_0 = arith.constant 0 : i32
    %c0_i32_1 = arith.constant 0 : i32
    return %c0_i32, %c0_i32_0 : i32, i32
  }
  func.func @transform_17(%arg0: i32) -> (i32, i32) {
    %c0_i32 = arith.constant 0 : i32
    %c0_i32_0 = arith.constant 0 : i32
    %c0_i32_1 = arith.constant 0 : i32
    return %c0_i32, %c0_i32_0 : i32, i32
  }
  func.func @transform_18(%arg0: i32) -> (i32, i32) {
    %c0_i32 = arith.constant 0 : i32
    %c0_i32_0 = arith.constant 0 : i32
    %c0_i32_1 = arith.constant 0 : i32
    return %c0_i32, %c0_i32_0 : i32, i32
  }
  func.func @transform_19(%arg0: i32) -> (i32, i32) {
    %c0_i32 = arith.constant 0 : i32
    %c0_i32_0 = arith.constant 0 : i32
    %c0_i32_1 = arith.constant 0 : i32
    return %c0_i32, %c0_i32_0 : i32, i32
  }
  func.func @transform_20(%arg0: i32) -> (i32, i32) {
    %c0_i32 = arith.constant 0 : i32
    %c0_i32_0 = arith.constant 0 : i32
    %c0_i32_1 = arith.constant 0 : i32
    return %c0_i32, %c0_i32_0 : i32, i32
  }
  func.func @transform_21(%arg0: i32) -> (i32, i32) {
    %c0_i32 = arith.constant 0 : i32
    %c0_i32_0 = arith.constant 0 : i32
    %c0_i32_1 = arith.constant 0 : i32
    return %c0_i32, %c0_i32_0 : i32, i32
  }
}

</mosaic_0001>

<llo_original>
// kernel: net_forward.1
$region0: #{net_forward.1}
  #allocation0 [shape = 'u32[]', space=smem, size = 0x4, offset = 0x4, fixed_abs, tag = 'smem constant byte address 0x4 - core index']
  #allocation1 [shape = 'u32[144,128]{1,0:T(1,128)}', space=vmem, size = 0x12000, scoped, tag = 'internal scratch']
  %s0 = inlined_call_operand.vmem [shape: f32[16,8], index: 0, kind: input, shape index: {}]
  %s1 = inlined_call_operand.vmem [shape: bf16[16,16], index: 1, kind: input, shape index: {}]
  %s2 = inlined_call_operand.vmem [shape: f32[16,2], index: 2, kind: input, shape index: {}]
  %s3 = inlined_call_operand.vmem [shape: f32[2,16], index: 3, kind: input, shape index: {}]
  %s4 = inlined_call_operand.vmem [shape: f32[16,1], index: 4, kind: input, shape index: {}]
  %s5 = inlined_call_operand.vmem [shape: f32[16,1], index: 5, kind: input, shape index: {}]
  %s6 = inlined_call_operand.vmem [shape: bf16[8,32], index: 6, kind: input, shape index: {}]
  %s7 = inlined_call_operand.vmem [shape: bf16[8,32], index: 7, kind: input, shape index: {}]
  %s8 = inlined_call_operand.vmem [shape: f32[1,32], index: 8, kind: input, shape index: {}]
  %s9 = inlined_call_operand.vmem [shape: f32[32,1], index: 9, kind: input, shape index: {}]
  %s10 = inlined_call_operand.vmem [shape: f32[1,32], index: 10, kind: input, shape index: {}]
  %s11 = inlined_call_operand.vmem [shape: bf16[32,32], index: 11, kind: input, shape index: {}]
  %s12 = inlined_call_operand.vmem [shape: bf16[32,32], index: 12, kind: input, shape index: {}]
  %s13 = inlined_call_operand.vmem [shape: f32[1,32], index: 13, kind: input, shape index: {}]
  %s14 = inlined_call_operand.vmem [shape: f32[32,1], index: 14, kind: input, shape index: {}]
  %s15 = inlined_call_operand.vmem [shape: f32[1,32], index: 15, kind: input, shape index: {}]
  %s16 = inlined_call_operand.vmem [shape: bf16[32,32], index: 16, kind: input, shape index: {}]
  %s17 = inlined_call_operand.vmem [shape: bf16[32,32], index: 17, kind: input, shape index: {}]
  %s18 = inlined_call_operand.vmem [shape: f32[1,32], index: 18, kind: input, shape index: {}]
  %s19 = inlined_call_operand.vmem [shape: bf16[32,4], index: 19, kind: input, shape index: {}]
  %s20 = inlined_call_operand.vmem [shape: f32[1,4], index: 20, kind: input, shape index: {}]
  %s21 = inlined_call_operand.hbm [shape: f32[2,4], index: 21, kind: output, shape index: {}]
  %s22 = sld [smem:[#allocation0]]
  $region94: #{net_forward.1} parent=0
    _
  %s24 = ssub.s32 1, %s22
  %s25 = scalar_select 0, %s24, %s22
  $region1: #{net_forward.1} parent=0
    #allocation2 [shape = 'u8[1024]{0}', space=vmem, size = 0x400, scoped, tag = 'output window, operand 0, single buffered']
    #allocation3 [shape = 's32[1]{0}', space=sflag, size = 0x4, scoped, tag = 'scoped memory for net_forward.1']
    %26 = vsyncpa [#allocation3], 0
    // Predicated region
    $region2: #{net_forward.1} parent=1 // pred_check
      _
    $region3: #{net_forward.1} parent=1 // pred_check_branch
      %28 = sbr.rel (0) target = $region5
    $region4: #{net_forward.1} parent=1 // pred_region
      _
    $region5: #{net_forward.1} parent=1 // pred_fallthru
      _
    // Predicated region
    $region6: #{net_forward.1} parent=1 // pred_check
      _
    $region7: #{net_forward.1} parent=1 // pred_check_branch
      %30 = sbr.rel (0) target = $region9
    $region8: #{net_forward.1} parent=1 // pred_region
      _
    $region9: #{net_forward.1} parent=1 // pred_fallthru
      _
    // Predicated region
    $region10: #{net_forward.1} parent=1 // pred_check
      _
    $region11: #{net_forward.1} parent=1 // pred_check_branch
      %32 = sbr.rel (0) target = $region13
    $region12: #{net_forward.1} parent=1 // pred_region
      _
    $region13: #{net_forward.1} parent=1 // pred_fallthru
      _
    // Predicated region
    $region14: #{net_forward.1} parent=1 // pred_check
      _
    $region15: #{net_forward.1} parent=1 // pred_check_branch
      %34 = sbr.rel (0) target = $region17
    $region16: #{net_forward.1} parent=1 // pred_region
      _
    $region17: #{net_forward.1} parent=1 // pred_fallthru
      _
    // Predicated region
    $region18: #{net_forward.1} parent=1 // pred_check
      _
    $region19: #{net_forward.1} parent=1 // pred_check_branch
      %36 = sbr.rel (0) target = $region21
    $region20: #{net_forward.1} parent=1 // pred_region
      _
    $region21: #{net_forward.1} parent=1 // pred_fallthru
      _
    // Predicated region
    $region22: #{net_forward.1} parent=1 // pred_check
      _
    $region23: #{net_forward.1} parent=1 // pred_check_branch
      %38 = sbr.rel (0) target = $region25
    $region24: #{net_forward.1} parent=1 // pred_region
      _
    $region25: #{net_forward.1} parent=1 // pred_fallthru
      _
    // Predicated region
    $region26: #{net_forward.1} parent=1 // pred_check
      _
    $region27: #{net_forward.1} parent=1 // pred_check_branch
      %40 = sbr.rel (0) target = $region29
    $region28: #{net_forward.1} parent=1 // pred_region
      _
    $region29: #{net_forward.1} parent=1 // pred_fallthru
      _
    // Predicated region
    $region30: #{net_forward.1} parent=1 // pred_check
      _
    $region31: #{net_forward.1} parent=1 // pred_check_branch
      %42 = sbr.rel (0) target = $region33
    $region32: #{net_forward.1} parent=1 // pred_region
      _
    $region33: #{net_forward.1} parent=1 // pred_fallthru
      _
    // Predicated region
    $region34: #{net_forward.1} parent=1 // pred_check
      _
    $region35: #{net_forward.1} parent=1 // pred_check_branch
      %44 = sbr.rel (0) target = $region37
    $region36: #{net_forward.1} parent=1 // pred_region
      _
    $region37: #{net_forward.1} parent=1 // pred_fallthru
      _
    // Predicated region
    $region38: #{net_forward.1} parent=1 // pred_check
      _
    $region39: #{net_forward.1} parent=1 // pred_check_branch
      %46 = sbr.rel (0) target = $region41
    $region40: #{net_forward.1} parent=1 // pred_region
      _
    $region41: #{net_forward.1} parent=1 // pred_fallthru
      _
    // Predicated region
    $region42: #{net_forward.1} parent=1 // pred_check
      _
    $region43: #{net_forward.1} parent=1 // pred_check_branch
      %48 = sbr.rel (0) target = $region45
    $region44: #{net_forward.1} parent=1 // pred_region
      _
    $region45: #{net_forward.1} parent=1 // pred_fallthru
      _
    // Predicated region
    $region46: #{net_forward.1} parent=1 // pred_check
      _
    $region47: #{net_forward.1} parent=1 // pred_check_branch
      %50 = sbr.rel (0) target = $region49
    $region48: #{net_forward.1} parent=1 // pred_region
      _
    $region49: #{net_forward.1} parent=1 // pred_fallthru
      _
    // Predicated region
    $region50: #{net_forward.1} parent=1 // pred_check
      _
    $region51: #{net_forward.1} parent=1 // pred_check_branch
      %52 = sbr.rel (0) target = $region53
    $region52: #{net_forward.1} parent=1 // pred_region
      _
    $region53: #{net_forward.1} parent=1 // pred_fallthru
      _
    // Predicated region
    $region54: #{net_forward.1} parent=1 // pred_check
      _
    $region55: #{net_forward.1} parent=1 // pred_check_branch
      %54 = sbr.rel (0) target = $region57
    $region56: #{net_forward.1} parent=1 // pred_region
      _
    $region57: #{net_forward.1} parent=1 // pred_fallthru
      _
    // Predicated region
    $region58: #{net_forward.1} parent=1 // pred_check
      _
    $region59: #{net_forward.1} parent=1 // pred_check_branch
      %56 = sbr.rel (0) target = $region61
    $region60: #{net_forward.1} parent=1 // pred_region
      _
    $region61: #{net_forward.1} parent=1 // pred_fallthru
      _
    // Predicated region
    $region62: #{net_forward.1} parent=1 // pred_check
      _
    $region63: #{net_forward.1} parent=1 // pred_check_branch
      %58 = sbr.rel (0) target = $region65
    $region64: #{net_forward.1} parent=1 // pred_region
      _
    $region65: #{net_forward.1} parent=1 // pred_fallthru
      _
    // Predicated region
    $region66: #{net_forward.1} parent=1 // pred_check
      _
    $region67: #{net_forward.1} parent=1 // pred_check_branch
      %60 = sbr.rel (0) target = $region69
    $region68: #{net_forward.1} parent=1 // pred_region
      _
    $region69: #{net_forward.1} parent=1 // pred_fallthru
      _
    // Predicated region
    $region70: #{net_forward.1} parent=1 // pred_check
      _
    $region71: #{net_forward.1} parent=1 // pred_check_branch
      %62 = sbr.rel (0) target = $region73
    $region72: #{net_forward.1} parent=1 // pred_region
      _
    $region73: #{net_forward.1} parent=1 // pred_fallthru
      _
    // Predicated region
    $region74: #{net_forward.1} parent=1 // pred_check
      _
    $region75: #{net_forward.1} parent=1 // pred_check_branch
      %64 = sbr.rel (0) target = $region77
    $region76: #{net_forward.1} parent=1 // pred_region
      _
    $region77: #{net_forward.1} parent=1 // pred_fallthru
      _
    // Predicated region
    $region78: #{net_forward.1} parent=1 // pred_check
      _
    $region79: #{net_forward.1} parent=1 // pred_check_branch
      %66 = sbr.rel (0) target = $region81
    $region80: #{net_forward.1} parent=1 // pred_region
      _
    $region81: #{net_forward.1} parent=1 // pred_fallthru
      _
    // Predicated region
    $region82: #{net_forward.1} parent=1 // pred_check
      _
    $region83: #{net_forward.1} parent=1 // pred_check_branch
      %68 = sbr.rel (0) target = $region85
    $region84: #{net_forward.1} parent=1 // pred_region
      _
    $region85: #{net_forward.1} parent=1 // pred_fallthru
      _
    %v70 = vld [vmem:[%s0] sm:$0xff]
    %v71 = vld [vmem:[%s0 + $0x8] sm:$0xff]
    %v72 = vpack.c.bf16 %v71, %v70
    %v73 = vld [vmem:[%s1] sm:$0xf]
    %v74 = vld [vmem:[%s1 + $0x4] sm:$0xf]
    %v75 = vld [vmem:[%s2] sm:$0xff]
    %v76 = vld [vmem:[%s2 + $0x8] sm:$0xff]
    %v77 = vld [vmem:[%s3] sm:$0x3]
    %v78 = vlaneseq
    %v79 = vshrl.u32 %v78, 7
    %v80 = vadd.s32 %v79, 8
    %v81 = vlaneseq
    %v82 = vand.u32 %v81, 127
    %vm83 = vcmp.lt.s32.totalorder %v82, %v79
    %vm84 = vcmp.lt.s32.totalorder %v82, %v80
    %vm85 = vcmp.ne.s32.totalorder %v82, %v79
    %vm86 = vcmp.ne.s32.totalorder %v82, %v80
    %v89 = vunpack.c.l.b16 %v73
    %v90 = vunpack.c.l.b16 %v74
    %v91 = vpack.c.b16 %v90, %v89
    %vm92 = vcmask 130048
    %v94 = vsel %vm92, %v91, 0
    %96 = vmatprep.subr.bf16.mxu0 0
    %97 = vmatpush1.bf16.msra.mxu0 0
    %98 = vmatprep.subr.bf16.mxu0 0
    %99 = vmatpush1.bf16.msra.mxu0 0
    %100 = vmatprep.subr.bf16.mxu0 0
    %101 = vmatpush1.bf16.msra.mxu0 0
    %102 = vmatprep.subr.bf16.mxu0 0
    %103 = vmatpush1.bf16.msra.mxu0 0
    %104 = vmatprep.subr.bf16.mxu0 0
    %105 = vmatpush1.bf16.msra.mxu0 0
    %106 = vmatprep.subr.bf16.mxu0 0
    %107 = vmatpush1.bf16.msra.mxu0 0
    %108 = vmatprep.subr.bf16.mxu0 0
    %109 = vmatpush1.bf16.msra.mxu0 0
    %110 = vmatprep.subr.bf16.mxu0 0
    %111 = vmatpush1.bf16.msra.mxu0 %v72
    %112 = vmatprep.subr.bf16.mxu0 0
    %113 = vmatpush2.bf16.msra.mxu0 0
    %114 = vmatprep.subr.bf16.mxu0 0
    %115 = vmatpush2.bf16.msra.mxu0 0
    %116 = vmatprep.subr.bf16.mxu0 0
    %117 = vmatpush2.bf16.msra.mxu0 0
    %118 = vmatprep.subr.bf16.mxu0 0
    %119 = vmatpush2.bf16.msra.mxu0 0
    %120 = vmatprep.subr.bf16.mxu0 0
    %121 = vmatpush2.bf16.msra.mxu0 0
    %122 = vmatprep.subr.bf16.mxu0 0
    %123 = vmatpush2.bf16.msra.mxu0 0
    %124 = vmatprep.subr.bf16.mxu0 0
    %125 = vmatpush2.bf16.msra.mxu0 0
    %126 = vmatprep.subr.bf16.mxu0 0
    %127 = vmatpush2.bf16.msra.mxu0 0
    %128 = vmatprep.mubr.bf16.mxu0 0
    %129 = vmatmul.mubr.bf16.gmra.mxu0 %v94
    %v130 = vpop.f32.mrf.mxu0
    %v131 = vadd.f32 0.0, %v130
    %v132 = vpop.f32.mrf.mxu0
    %v133 = vpop.f32.mrf.mxu0
    %v134 = vadd.f32 0.0, %v133
    %v135 = vpop.f32.mrf.mxu0
    %136 = vdwg.mxu0
    %v137 = vpack.c.bf16 %v134, %v131
    %v138 = vld [vmem:[%s6] sm:$0xf]
    %v139 = vld [vmem:[%s7] sm:$0xf]
    %vm140 = vcmask 64512
    %v142 = vsel %vm140, %v72, 0
    %vm144 = vcmask 1043456
    %v146 = vsel %vm144, %v139, 0
    %148 = vmatprep.subr.bf16.mxu0 0
    %149 = vmatpush1.bf16.msra.mxu0 0
    %150 = vmatprep.subr.bf16.mxu0 0
    %151 = vmatpush1.bf16.msra.mxu0 0
    %152 = vmatprep.subr.bf16.mxu0 0
    %153 = vmatpush1.bf16.msra.mxu0 0
    %154 = vmatprep.subr.bf16.mxu0 0
    %155 = vmatpush1.bf16.msra.mxu0 0
    %156 = vmatprep.subr.bf16.mxu0 0
    %157 = vmatpush1.bf16.msra.mxu0 0
    %158 = vmatprep.subr.bf16.mxu0 0
    %159 = vmatpush1.bf16.msra.mxu0 0
    %160 = vmatprep.subr.bf16.mxu0 0
    %161 = vmatpush1.bf16.msra.mxu0 0
    %162 = vmatprep.subr.bf16.mxu0 0
    %163 = vmatpush1.bf16.msra.mxu0 %v146
    %164 = vmatprep.subr.bf16.mxu0 0
    %165 = vmatpush2.bf16.msra.mxu0 0
    %166 = vmatprep.subr.bf16.mxu0 0
    %167 = vmatpush2.bf16.msra.mxu0 0
    %168 = vmatprep.subr.bf16.mxu0 0
    %169 = vmatpush2.bf16.msra.mxu0 0
    %170 = vmatprep.subr.bf16.mxu0 0
    %171 = vmatpush2.bf16.msra.mxu0 0
    %172 = vmatprep.subr.bf16.mxu0 0
    %173 = vmatpush2.bf16.msra.mxu0 0
    %174 = vmatprep.subr.bf16.mxu0 0
    %175 = vmatpush2.bf16.msra.mxu0 0
    %176 = vmatprep.subr.bf16.mxu0 0
    %177 = vmatpush2.bf16.msra.mxu0 0
    %178 = vmatprep.subr.bf16.mxu0 0
    %179 = vmatpush2.bf16.msra.mxu0 0
    %180 = vmatprep.mubr.bf16.mxu0 0
    %181 = vmatmul.mubr.bf16.gmra.mxu0 %v142
    %v182 = vpop.f32.mrf.mxu0
    %v183 = vadd.f32 0.0, %v182
    %v184 = vpop.f32.mrf.mxu0
    %v185 = vpop.f32.mrf.mxu0
    %v186 = vadd.f32 0.0, %v185
    %v187 = vpop.f32.mrf.mxu0
    %188 = vdwg.mxu0
    %v190 = vsel %vm140, %v137, 0
    %v193 = vsel %vm144, %v138, 0
    %195 = vmatprep.subr.bf16.mxu0 0
    %196 = vmatpush1.bf16.msra.mxu0 0
    %197 = vmatprep.subr.bf16.mxu0 0
    %198 = vmatpush1.bf16.msra.mxu0 0
    %199 = vmatprep.subr.bf16.mxu0 0
    %200 = vmatpush1.bf16.msra.mxu0 0
    %201 = vmatprep.subr.bf16.mxu0 0
    %202 = vmatpush1.bf16.msra.mxu0 0
    %203 = vmatprep.subr.bf16.mxu0 0
    %204 = vmatpush1.bf16.msra.mxu0 0
    %205 = vmatprep.subr.bf16.mxu0 0
    %206 = vmatpush1.bf16.msra.mxu0 0
    %207 = vmatprep.subr.bf16.mxu0 0
    %208 = vmatpush1.bf16.msra.mxu0 0
    %209 = vmatprep.subr.bf16.mxu0 0
    %210 = vmatpush1.bf16.msra.mxu0 %v193
    %211 = vmatprep.subr.bf16.mxu0 0
    %212 = vmatpush2.bf16.msra.mxu0 0
    %213 = vmatprep.subr.bf16.mxu0 0
    %214 = vmatpush2.bf16.msra.mxu0 0
    %215 = vmatprep.subr.bf16.mxu0 0
    %216 = vmatpush2.bf16.msra.mxu0 0
    %217 = vmatprep.subr.bf16.mxu0 0
    %218 = vmatpush2.bf16.msra.mxu0 0
    %219 = vmatprep.subr.bf16.mxu0 0
    %220 = vmatpush2.bf16.msra.mxu0 0
    %221 = vmatprep.subr.bf16.mxu0 0
    %222 = vmatpush2.bf16.msra.mxu0 0
    %223 = vmatprep.subr.bf16.mxu0 0
    %224 = vmatpush2.bf16.msra.mxu0 0
    %225 = vmatprep.subr.bf16.mxu0 0
    %226 = vmatpush2.bf16.msra.mxu0 0
    %227 = vmatprep.mubr.bf16.mxu0 0
    %228 = vmatmul.mubr.bf16.gmra.mxu0 %v190
    %v229 = vpop.f32.mrf.mxu0
    %v230 = vadd.f32 %v183, %v229
    %v231 = vpop.f32.mrf.mxu0
    %v232 = vpop.f32.mrf.mxu0
    %v233 = vadd.f32 %v186, %v232
    %v234 = vpop.f32.mrf.mxu0
    %235 = vdwg.mxu0
    %v236 = vld [vmem:[%s8] sm:$0x1]
    %v238 = vlaneseq
    %v239 = vshrl.u32 %v238, 7
    %v240 = vsub.s32 0, %v239
    %v241 = vrot.slane %v236, %v240
    %v243 = vadd.f32 %v230, %v241
    %v244 = vadd.f32 %v233, %v241
    %v245 = vmax.f32 %v243, 0.0
    %v246 = vmax.f32 %v244, 0.0
    %v247 = vld [vmem:[%s9] sm:$0xff]
    %v248 = vld [vmem:[%s9 + $0x8] sm:$0xff]
    %v249 = vld [vmem:[%s9 + $0x10] sm:$0xff]
    %v250 = vld [vmem:[%s9 + $0x18] sm:$0xff]
    %vm251 = vcmask 261120
    %v253 = vsel %vm251, %v245, 0
    %v256 = vsel %vm251, %v246, 0
    %258 = vmatprep.subr.mxu0 0.0
    %259 = vmatpush1.msra.mxu0 0.0
    %260 = vmatprep.subr.mxu0 0.0
    %261 = vmatpush1.msra.mxu0 0.0
    %262 = vmatprep.subr.mxu0 0.0
    %263 = vmatpush1.msra.mxu0 0.0
    %264 = vmatprep.subr.mxu0 0.0
    %265 = vmatpush1.msra.mxu0 0.0
    %266 = vmatprep.subr.mxu0 0.0
    %267 = vmatpush1.msra.mxu0 0.0
    %268 = vmatprep.subr.mxu0 0.0
    %269 = vmatpush1.msra.mxu0 0.0
    %270 = vmatprep.subr.mxu0 0.0
    %271 = vmatpush1.msra.mxu0 0.0
    %272 = vmatprep.subr.mxu0 0.0
    %273 = vmatpush1.msra.mxu0 0.0
    %274 = vmatprep.subr.mxu0 0.0
    %275 = vmatpush1.msra.mxu0 0.0
    %276 = vmatprep.subr.mxu0 0.0
    %277 = vmatpush1.msra.mxu0 0.0
    %278 = vmatprep.subr.mxu0 0.0
    %279 = vmatpush1.msra.mxu0 0.0
    %280 = vmatprep.subr.mxu0 0.0
    %281 = vmatpush1.msra.mxu0 0.0
    %282 = vmatprep.subr.mxu0 0.0
    %283 = vmatpush1.msra.mxu0 %v250
    %284 = vmatprep.subr.mxu0 0.0
    %285 = vmatpush1.msra.mxu0 %v249
    %286 = vmatprep.subr.mxu0 0.0
    %287 = vmatpush1.msra.mxu0 %v248
    %288 = vmatprep.subr.mxu0 0.0
    %289 = vmatpush1.msra.mxu0 %v247
    %290 = vmatprep.subr.mxu0 0.0
    %291 = vmatpush2.msra.mxu0 0.0
    %292 = vmatprep.subr.mxu0 0.0
    %293 = vmatpush2.msra.mxu0 0.0
    %294 = vmatprep.subr.mxu0 0.0
    %295 = vmatpush2.msra.mxu0 0.0
    %296 = vmatprep.subr.mxu0 0.0
    %297 = vmatpush2.msra.mxu0 0.0
    %298 = vmatprep.subr.mxu0 0.0
    %299 = vmatpush2.msra.mxu0 0.0
    %300 = vmatprep.subr.mxu0 0.0
    %301 = vmatpush2.msra.mxu0 0.0
    %302 = vmatprep.subr.mxu0 0.0
    %303 = vmatpush2.msra.mxu0 0.0
    %304 = vmatprep.subr.mxu0 0.0
    %305 = vmatpush2.msra.mxu0 0.0
    %306 = vmatprep.subr.mxu0 0.0
    %307 = vmatpush2.msra.mxu0 0.0
    %308 = vmatprep.subr.mxu0 0.0
    %309 = vmatpush2.msra.mxu0 0.0
    %310 = vmatprep.subr.mxu0 0.0
    %311 = vmatpush2.msra.mxu0 0.0
    %312 = vmatprep.subr.mxu0 0.0
    %313 = vmatpush2.msra.mxu0 0.0
    %314 = vmatprep.subr.mxu0 0.0
    %315 = vmatpush2.msra.mxu0 0.0
    %316 = vmatprep.subr.mxu0 0.0
    %317 = vmatpush2.msra.mxu0 0.0
    %318 = vmatprep.subr.mxu0 0.0
    %319 = vmatpush2.msra.mxu0 0.0
    %320 = vmatprep.subr.mxu0 0.0
    %321 = vmatpush2.msra.mxu0 0.0
    %322 = vmatprep.mubr.f32.mxu0 0.0
    %323 = vmatmul.mubr.f32.gmra.mxu0 %v253
    %v324 = vpop.f32.mrf.mxu0
    %v325 = vadd.f32 0.0, %v324
    %v326 = vpop.f32.mrf.mxu0
    %327 = vmatprep.mubr.f32.mxu0 0.0
    %328 = vmatmul.mubr.f32.gmra.mxu0 %v256
    %v329 = vpop.f32.mrf.mxu0
    %v330 = vadd.f32 0.0, %v329
    %v331 = vpop.f32.mrf.mxu0
    %332 = vdwg.mxu0
    %v333 = vld [vmem:[%s10] sm:$0x1]
    %v335 = vsel %vm251, %v333, 0
    %337 = vmatprep.subr.mxu0 0.0
    %338 = vmatpush1.xpose.msra.mxu0 0.0
    %339 = vmatprep.subr.mxu0 0.0
    %340 = vmatpush1.xpose.msra.mxu0 0.0
    %341 = vmatprep.subr.mxu0 0.0
    %342 = vmatpush1.xpose.msra.mxu0 0.0
    %343 = vmatprep.subr.mxu0 0.0
    %344 = vmatpush1.xpose.msra.mxu0 0.0
    %345 = vmatprep.subr.mxu0 0.0
    %346 = vmatpush1.xpose.msra.mxu0 0.0
    %347 = vmatprep.subr.mxu0 0.0
    %348 = vmatpush1.xpose.msra.mxu0 0.0
    %349 = vmatprep.subr.mxu0 0.0
    %350 = vmatpush1.xpose.msra.mxu0 0.0
    %351 = vmatprep.subr.mxu0 0.0
    %352 = vmatpush1.xpose.msra.mxu0 0.0
    %353 = vmatprep.subr.mxu0 0.0
    %354 = vmatpush1.xpose.msra.mxu0 0.0
    %355 = vmatprep.subr.mxu0 0.0
    %356 = vmatpush1.xpose.msra.mxu0 0.0
    %357 = vmatprep.subr.mxu0 0.0
    %358 = vmatpush1.xpose.msra.mxu0 0.0
    %359 = vmatprep.subr.mxu0 0.0
    %360 = vmatpush1.xpose.msra.mxu0 0.0
    %361 = vmatprep.subr.mxu0 0.0
    %362 = vmatpush1.xpose.msra.mxu0 0.0
    %363 = vmatprep.subr.mxu0 0.0
    %364 = vmatpush1.xpose.msra.mxu0 0.0
    %365 = vmatprep.subr.mxu0 0.0
    %366 = vmatpush1.xpose.msra.mxu0 %v256
    %367 = vmatprep.subr.mxu0 0.0
    %368 = vmatpush1.xpose.msra.mxu0 %v253
    %369 = vmatprep.subr.mxu0 0.0
    %370 = vmatpush2.xpose.msra.mxu0 0.0
    %371 = vmatprep.subr.mxu0 0.0
    %372 = vmatpush2.xpose.msra.mxu0 0.0
    %373 = vmatprep.subr.mxu0 0.0
    %374 = vmatpush2.xpose.msra.mxu0 0.0
    %375 = vmatprep.subr.mxu0 0.0
    %376 = vmatpush2.xpose.msra.mxu0 0.0
    %377 = vmatprep.subr.mxu0 0.0
    %378 = vmatpush2.xpose.msra.mxu0 0.0
    %379 = vmatprep.subr.mxu0 0.0
    %380 = vmatpush2.xpose.msra.mxu0 0.0
    %381 = vmatprep.subr.mxu0 0.0
    %382 = vmatpush2.xpose.msra.mxu0 0.0
    %383 = vmatprep.subr.mxu0 0.0
    %384 = vmatpush2.xpose.msra.mxu0 0.0
    %385 = vmatprep.subr.mxu0 0.0
    %386 = vmatpush2.xpose.msra.mxu0 0.0
    %387 = vmatprep.subr.mxu0 0.0
    %388 = vmatpush2.xpose.msra.mxu0 0.0
    %389 = vmatprep.subr.mxu0 0.0
    %390 = vmatpush2.xpose.msra.mxu0 0.0
    %391 = vmatprep.subr.mxu0 0.0
    %392 = vmatpush2.xpose.msra.mxu0 0.0
    %393 = vmatprep.subr.mxu0 0.0
    %394 = vmatpush2.xpose.msra.mxu0 0.0
    %395 = vmatprep.subr.mxu0 0.0
    %396 = vmatpush2.xpose.msra.mxu0 0.0
    %397 = vmatprep.subr.mxu0 0.0
    %398 = vmatpush2.xpose.msra.mxu0 0.0
    %399 = vmatprep.subr.mxu0 0.0
    %400 = vmatpush2.xpose.msra.mxu0 0.0
    %401 = vmatprep.mubr.f32.mxu0 0.0
    %402 = vmatmul.mubr.f32.gmra.mxu0 %v335
    %v403 = vpop.f32.mrf.mxu0
    %v404 = vadd.f32 0.0, %v403
    %v405 = vpop.f32.mrf.mxu0
    %406 = vdwg.mxu0
    %vm407 = vcmask 15360
    %v409 = vsel %vm407, %v75, 0
    %v412 = vsel %vm407, %v76, 0
    %414 = vmatprep.subr.mxu0 0.0
    %415 = vmatpush1.xpose.msra.mxu0 0.0
    %416 = vmatprep.subr.mxu0 0.0
    %417 = vmatpush1.xpose.msra.mxu0 0.0
    %418 = vmatprep.subr.mxu0 0.0
    %419 = vmatpush1.xpose.msra.mxu0 0.0
    %420 = vmatprep.subr.mxu0 0.0
    %421 = vmatpush1.xpose.msra.mxu0 0.0
    %422 = vmatprep.subr.mxu0 0.0
    %423 = vmatpush1.xpose.msra.mxu0 0.0
    %424 = vmatprep.subr.mxu0 0.0
    %425 = vmatpush1.xpose.msra.mxu0 0.0
    %426 = vmatprep.subr.mxu0 0.0
    %427 = vmatpush1.xpose.msra.mxu0 0.0
    %428 = vmatprep.subr.mxu0 0.0
    %429 = vmatpush1.xpose.msra.mxu0 0.0
    %430 = vmatprep.subr.mxu0 0.0
    %431 = vmatpush1.xpose.msra.mxu0 0.0
    %432 = vmatprep.subr.mxu0 0.0
    %433 = vmatpush1.xpose.msra.mxu0 0.0
    %434 = vmatprep.subr.mxu0 0.0
    %435 = vmatpush1.xpose.msra.mxu0 0.0
    %436 = vmatprep.subr.mxu0 0.0
    %437 = vmatpush1.xpose.msra.mxu0 0.0
    %438 = vmatprep.subr.mxu0 0.0
    %439 = vmatpush1.xpose.msra.mxu0 0.0
    %440 = vmatprep.subr.mxu0 0.0
    %441 = vmatpush1.xpose.msra.mxu0 0.0
    %442 = vmatprep.subr.mxu0 0.0
    %443 = vmatpush1.xpose.msra.mxu0 %v412
    %444 = vmatprep.subr.mxu0 0.0
    %445 = vmatpush1.xpose.msra.mxu0 %v409
    %446 = vmatprep.subr.mxu0 0.0
    %447 = vmatpush2.xpose.msra.mxu0 0.0
    %448 = vmatprep.subr.mxu0 0.0
    %449 = vmatpush2.xpose.msra.mxu0 0.0
    %450 = vmatprep.subr.mxu0 0.0
    %451 = vmatpush2.xpose.msra.mxu0 0.0
    %452 = vmatprep.subr.mxu0 0.0
    %453 = vmatpush2.xpose.msra.mxu0 0.0
    %454 = vmatprep.subr.mxu0 0.0
    %455 = vmatpush2.xpose.msra.mxu0 0.0
    %456 = vmatprep.subr.mxu0 0.0
    %457 = vmatpush2.xpose.msra.mxu0 0.0
    %458 = vmatprep.subr.mxu0 0.0
    %459 = vmatpush2.xpose.msra.mxu0 0.0
    %460 = vmatprep.subr.mxu0 0.0
    %461 = vmatpush2.xpose.msra.mxu0 0.0
    %462 = vmatprep.subr.mxu0 0.0
    %463 = vmatpush2.xpose.msra.mxu0 0.0
    %464 = vmatprep.subr.mxu0 0.0
    %465 = vmatpush2.xpose.msra.mxu0 0.0
    %466 = vmatprep.subr.mxu0 0.0
    %467 = vmatpush2.xpose.msra.mxu0 0.0
    %468 = vmatprep.subr.mxu0 0.0
    %469 = vmatpush2.xpose.msra.mxu0 0.0
    %470 = vmatprep.subr.mxu0 0.0
    %471 = vmatpush2.xpose.msra.mxu0 0.0
    %472 = vmatprep.subr.mxu0 0.0
    %473 = vmatpush2.xpose.msra.mxu0 0.0
    %474 = vmatprep.subr.mxu0 0.0
    %475 = vmatpush2.xpose.msra.mxu0 0.0
    %476 = vmatprep.subr.mxu0 0.0
    %477 = vmatpush2.xpose.msra.mxu0 0.0
    %478 = vmatprep.mubr.f32.mxu0 0.0
    %479 = vmatmul.mubr.f32.gmra.mxu0 %v409
    %v480 = vpop.f32.mrf.mxu0
    %v481 = vadd.f32 0.0, %v480
    %v482 = vpop.f32.mrf.mxu0
    %483 = vmatprep.mubr.f32.mxu0 0.0
    %484 = vmatmul.mubr.f32.gmra.mxu0 %v412
    %v485 = vpop.f32.mrf.mxu0
    %v486 = vadd.f32 0.0, %v485
    %v487 = vpop.f32.mrf.mxu0
    %488 = vdwg.mxu0
    %v489 = vlaneseq
    %v490 = vshrl.u32 %v489, 7
    %v491 = vsub.s32 0, %v490
    %v492 = vrot.slane %v404, %v491
    %494 = vset.pattern.permute.xlu0 0
    %495 = vperm.xlu0 %494, %v325
    %v496 = vpop.permute.xlu0 %495
    %499 = vset.pattern.permute.xlu0 0
    %500 = vperm.xlu0 %499, %v330
    %v501 = vpop.permute.xlu0 %500
    %vm503 = vcmp.gt.f32.partialorder %v492, %v496
    %vm504 = vcmp.gt.f32.partialorder %v492, %v501
    %vm505 = vcmp.eq.f32.partialorder %v492, %v496
    %vm506 = vcmp.eq.f32.partialorder %v492, %v501
    %vm507 = vmand %vm505, %vm83
    %vm508 = vmand %vm506, %vm84
    %vm509 = vmor %vm503, %vm507
    %vm510 = vmor %vm504, %vm508
    %vm511 = vmand %vm85, %vm509
    %vm512 = vmand %vm86, %vm510
    %v513 = vsel %vm511, %v481, 0.0
    %v514 = vsel %vm512, %v486, 0.0
    %v515 = vsel %vm92, %v513, 0.0
    %516 = vadd.xlane.f32.xlu0 %v515
    %v517 = vpop.xlane.xlu0 %516
    %v518 = vsel %vm92, %v514, 0.0
    %519 = vadd.xlane.f32.xlu0 %v518
    %v520 = vpop.xlane.xlu0 %519
    %v521 = vld [vmem:[%s4] sm:$0xff]
    %v522 = vld [vmem:[%s4 + $0x8] sm:$0xff]
    %vm523 = vcmp.lt.f32.partialorder %v517, %v521
    %vm524 = vcmp.lt.f32.partialorder %v520, %v522
    %v525 = vsel %vm523, 1, 0
    %v526 = vsel %vm524, 1, 0
    %v527 = vcvt.s32.f32 %v525
    %v528 = vcvt.s32.f32 %v526
    %v529 = vtanh.pop %v325
    %v530 = vtanh.pop %v330
    %v531 = vmul.f32 %v529, %v527
    %v532 = vmul.f32 %v530, %v528
    %534 = vset.pattern.permute.xlu0 0
    %535 = vperm.xlu0 %534, %v531
    %v536 = vpop.permute.xlu0 %535
    %539 = vset.pattern.permute.xlu0 0
    %540 = vperm.xlu0 %539, %v532
    %v541 = vpop.permute.xlu0 %540
    %v543 = vmul.f32 %v245, %v536
    %v544 = vmul.f32 %v246, %v541
    %v546 = vsel %vm92, %v77, 0
    %548 = vmatprep.subr.mxu0 0.0
    %549 = vmatpush1.msra.mxu0 0.0
    %550 = vmatprep.subr.mxu0 0.0
    %551 = vmatpush1.msra.mxu0 0.0
    %552 = vmatprep.subr.mxu0 0.0
    %553 = vmatpush1.msra.mxu0 0.0
    %554 = vmatprep.subr.mxu0 0.0
    %555 = vmatpush1.msra.mxu0 0.0
    %556 = vmatprep.subr.mxu0 0.0
    %557 = vmatpush1.msra.mxu0 0.0
    %558 = vmatprep.subr.mxu0 0.0
    %559 = vmatpush1.msra.mxu0 0.0
    %560 = vmatprep.subr.mxu0 0.0
    %561 = vmatpush1.msra.mxu0 0.0
    %562 = vmatprep.subr.mxu0 0.0
    %563 = vmatpush1.msra.mxu0 0.0
    %564 = vmatprep.subr.mxu0 0.0
    %565 = vmatpush1.msra.mxu0 0.0
    %566 = vmatprep.subr.mxu0 0.0
    %567 = vmatpush1.msra.mxu0 0.0
    %568 = vmatprep.subr.mxu0 0.0
    %569 = vmatpush1.msra.mxu0 0.0
    %570 = vmatprep.subr.mxu0 0.0
    %571 = vmatpush1.msra.mxu0 0.0
    %572 = vmatprep.subr.mxu0 0.0
    %573 = vmatpush1.msra.mxu0 0.0
    %574 = vmatprep.subr.mxu0 0.0
    %575 = vmatpush1.msra.mxu0 0.0
    %576 = vmatprep.subr.mxu0 0.0
    %577 = vmatpush1.msra.mxu0 %v528
    %578 = vmatprep.subr.mxu0 0.0
    %579 = vmatpush1.msra.mxu0 %v527
    %580 = vmatprep.subr.mxu0 0.0
    %581 = vmatpush2.msra.mxu0 0.0
    %582 = vmatprep.subr.mxu0 0.0
    %583 = vmatpush2.msra.mxu0 0.0
    %584 = vmatprep.subr.mxu0 0.0
    %585 = vmatpush2.msra.mxu0 0.0
    %586 = vmatprep.subr.mxu0 0.0
    %587 = vmatpush2.msra.mxu0 0.0
    %588 = vmatprep.subr.mxu0 0.0
    %589 = vmatpush2.msra.mxu0 0.0
    %590 = vmatprep.subr.mxu0 0.0
    %591 = vmatpush2.msra.mxu0 0.0
    %592 = vmatprep.subr.mxu0 0.0
    %593 = vmatpush2.msra.mxu0 0.0
    %594 = vmatprep.subr.mxu0 0.0
    %595 = vmatpush2.msra.mxu0 0.0
    %596 = vmatprep.subr.mxu0 0.0
    %597 = vmatpush2.msra.mxu0 0.0
    %598 = vmatprep.subr.mxu0 0.0
    %599 = vmatpush2.msra.mxu0 0.0
    %600 = vmatprep.subr.mxu0 0.0
    %601 = vmatpush2.msra.mxu0 0.0
    %602 = vmatprep.subr.mxu0 0.0
    %603 = vmatpush2.msra.mxu0 0.0
    %604 = vmatprep.subr.mxu0 0.0
    %605 = vmatpush2.msra.mxu0 0.0
    %606 = vmatprep.subr.mxu0 0.0
    %607 = vmatpush2.msra.mxu0 0.0
    %608 = vmatprep.subr.mxu0 0.0
    %609 = vmatpush2.msra.mxu0 0.0
    %610 = vmatprep.subr.mxu0 0.0
    %611 = vmatpush2.msra.mxu0 0.0
    %612 = vmatprep.mubr.f32.mxu0 0.0
    %613 = vmatmul.mubr.f32.gmra.mxu0 %v546
    %v614 = vpop.f32.mrf.mxu0
    %v615 = vadd.f32 0.0, %v614
    %v616 = vpop.f32.mrf.mxu0
    %617 = vdwg.mxu0
    %618 = vmatprep.subr.mxu0 0.0
    %619 = vmatpush1.msra.mxu0 0.0
    %620 = vmatprep.subr.mxu0 0.0
    %621 = vmatpush1.msra.mxu0 0.0
    %622 = vmatprep.subr.mxu0 0.0
    %623 = vmatpush1.msra.mxu0 0.0
    %624 = vmatprep.subr.mxu0 0.0
    %625 = vmatpush1.msra.mxu0 0.0
    %626 = vmatprep.subr.mxu0 0.0
    %627 = vmatpush1.msra.mxu0 0.0
    %628 = vmatprep.subr.mxu0 0.0
    %629 = vmatpush1.msra.mxu0 0.0
    %630 = vmatprep.subr.mxu0 0.0
    %631 = vmatpush1.msra.mxu0 0.0
    %632 = vmatprep.subr.mxu0 0.0
    %633 = vmatpush1.msra.mxu0 0.0
    %634 = vmatprep.subr.mxu0 0.0
    %635 = vmatpush1.msra.mxu0 0.0
    %636 = vmatprep.subr.mxu0 0.0
    %637 = vmatpush1.msra.mxu0 0.0
    %638 = vmatprep.subr.mxu0 0.0
    %639 = vmatpush1.msra.mxu0 0.0
    %640 = vmatprep.subr.mxu0 0.0
    %641 = vmatpush1.msra.mxu0 0.0
    %642 = vmatprep.subr.mxu0 0.0
    %643 = vmatpush1.msra.mxu0 0.0
    %644 = vmatprep.subr.mxu0 0.0
    %645 = vmatpush1.msra.mxu0 0.0
    %646 = vmatprep.subr.mxu0 0.0
    %647 = vmatpush1.msra.mxu0 %v544
    %648 = vmatprep.subr.mxu0 0.0
    %649 = vmatpush1.msra.mxu0 %v543
    %650 = vmatprep.subr.mxu0 0.0
    %651 = vmatpush2.msra.mxu0 0.0
    %652 = vmatprep.subr.mxu0 0.0
    %653 = vmatpush2.msra.mxu0 0.0
    %654 = vmatprep.subr.mxu0 0.0
    %655 = vmatpush2.msra.mxu0 0.0
    %656 = vmatprep.subr.mxu0 0.0
    %657 = vmatpush2.msra.mxu0 0.0
    %658 = vmatprep.subr.mxu0 0.0
    %659 = vmatpush2.msra.mxu0 0.0
    %660 = vmatprep.subr.mxu0 0.0
    %661 = vmatpush2.msra.mxu0 0.0
    %662 = vmatprep.subr.mxu0 0.0
    %663 = vmatpush2.msra.mxu0 0.0
    %664 = vmatprep.subr.mxu0 0.0
    %665 = vmatpush2.msra.mxu0 0.0
    %666 = vmatprep.subr.mxu0 0.0
    %667 = vmatpush2.msra.mxu0 0.0
    %668 = vmatprep.subr.mxu0 0.0
    %669 = vmatpush2.msra.mxu0 0.0
    %670 = vmatprep.subr.mxu0 0.0
    %671 = vmatpush2.msra.mxu0 0.0
    %672 = vmatprep.subr.mxu0 0.0
    %673 = vmatpush2.msra.mxu0 0.0
    %674 = vmatprep.subr.mxu0 0.0
    %675 = vmatpush2.msra.mxu0 0.0
    %676 = vmatprep.subr.mxu0 0.0
    %677 = vmatpush2.msra.mxu0 0.0
    %678 = vmatprep.subr.mxu0 0.0
    %679 = vmatpush2.msra.mxu0 0.0
    %680 = vmatprep.subr.mxu0 0.0
    %681 = vmatpush2.msra.mxu0 0.0
    %682 = vmatprep.mubr.f32.mxu0 0.0
    %683 = vmatmul.mubr.f32.gmra.mxu0 %v546
    %v684 = vpop.f32.mrf.mxu0
    %v685 = vadd.f32 0.0, %v684
    %v686 = vpop.f32.mrf.mxu0
    %687 = vdwg.mxu0
    %v688 = vmax.f32 %v615, 1.0
    %690 = vset.pattern.permute.xlu0 0
    %691 = vperm.xlu0 %690, %v688
    %v692 = vpop.permute.xlu0 %691
    %v694 = vrcp.pop %v692
    %v695 = vmul.f32 %v685, %v694
    %v696 = vmul.f32 %v75, %v527
    %v697 = vmul.f32 %v76, %v528
    %vm698 = vcmp.gt.f32.partialorder %v696, 0.0
    %vm699 = vcmp.gt.f32.partialorder %v697, 0.0
    %v700 = vsel %vm698, 1, 0
    %v701 = vsel %vm699, 1, 0
    %702 = vset.pattern.permute.xlu0 0
    %703 = vperm.xlu0 %702, %v700
    %v704 = vpop.permute.xlu0 %703
    %705 = vset.pattern.permute.xlu0 0
    %706 = vperm.xlu0 %705, %v701
    %v707 = vpop.permute.xlu0 %706
    %vm708 = vcmp.eq.s32.totalorder %v704, 1
    %vm709 = vcmp.eq.s32.totalorder %v707, 1
    %v710 = vsel %vm708, %v543, -3.4028235e+38
    %v711 = vsel %vm709, %v544, -3.4028235e+38
    %v712 = vsel %vm251, %v710, -inf
    %v713 = vsel %vm251, %v711, -inf
    %v714 = vmax.f32 %v712, %v713
    %v715 = vrot.slane %v714, 4
    %v716 = vmax.f32 %v714, %v715
    %v717 = vrot.slane %v716, 2
    %v718 = vmax.f32 %v716, %v717
    %v719 = vrot.slane %v718, 1
    %v720 = vmax.f32 %v718, %v719
    %723 = vrot.lane.b32.xlu0 %v527, 1
    %v724 = vpop.permute.xlu0 %723
    %725 = vrot.lane.b32.xlu0 %v528, 1
    %v726 = vpop.permute.xlu0 %725
    %v729 = vmul.f32 %v75, %v724
    %v730 = vmul.f32 %v76, %v726
    %vm731 = vcmp.gt.f32.partialorder %v729, 0.0
    %vm732 = vcmp.gt.f32.partialorder %v730, 0.0
    %v733 = vsel %vm731, 1, 0
    %v734 = vsel %vm732, 1, 0
    %735 = vset.pattern.permute.xlu0 1
    %736 = vperm.xlu0 %735, %v733
    %v737 = vpop.permute.xlu0 %736
    %738 = vset.pattern.permute.xlu0 1
    %739 = vperm.xlu0 %738, %v734
    %v740 = vpop.permute.xlu0 %739
    %vm741 = vcmp.eq.s32.totalorder %v737, 1
    %vm742 = vcmp.eq.s32.totalorder %v740, 1
    %v743 = vsel %vm741, %v543, -3.4028235e+38
    %v744 = vsel %vm742, %v544, -3.4028235e+38
    %v745 = vsel %vm251, %v743, -inf
    %v746 = vsel %vm251, %v744, -inf
    %v747 = vmax.f32 %v745, %v746
    %v748 = vrot.slane %v747, 4
    %v749 = vmax.f32 %v747, %v748
    %v750 = vrot.slane %v749, 2
    %v751 = vmax.f32 %v749, %v750
    %v752 = vrot.slane %v751, 1
    %v753 = vmax.f32 %v751, %v752
    %vm754 = vcmp.gt.f32.partialorder %v615, 0.0
    %vm755 = vcmask 1040384
    %v756 = vsel %vm755, %v720, %v753
    %v757 = vsel %vm754, 1, 0
    %758 = vset.pattern.permute.xlu0 0
    %759 = vperm.xlu0 %758, %v757
    %v760 = vpop.permute.xlu0 %759
    %vm761 = vcmp.eq.s32.totalorder %v760, 1
    %v762 = vsel %vm761, %v756, 0.0
    %v763 = vpack.c.bf16 %v544, %v543
    %764 = vmatprep.subr.bf16.mxu0 0
    %765 = vmatpush1.bf16.msra.mxu0 0
    %766 = vmatprep.subr.bf16.mxu0 0
    %767 = vmatpush1.bf16.msra.mxu0 0
    %768 = vmatprep.subr.bf16.mxu0 0
    %769 = vmatpush1.bf16.msra.mxu0 0
    %770 = vmatprep.subr.bf16.mxu0 0
    %771 = vmatpush1.bf16.msra.mxu0 0
    %772 = vmatprep.subr.bf16.mxu0 0
    %773 = vmatpush1.bf16.msra.mxu0 0
    %774 = vmatprep.subr.bf16.mxu0 0
    %775 = vmatpush1.bf16.msra.mxu0 0
    %776 = vmatprep.subr.bf16.mxu0 0
    %777 = vmatpush1.bf16.msra.mxu0 0
    %778 = vmatprep.subr.bf16.mxu0 0
    %779 = vmatpush1.bf16.msra.mxu0 %v763
    %780 = vmatprep.subr.bf16.mxu0 0
    %781 = vmatpush2.bf16.msra.mxu0 0
    %782 = vmatprep.subr.bf16.mxu0 0
    %783 = vmatpush2.bf16.msra.mxu0 0
    %784 = vmatprep.subr.bf16.mxu0 0
    %785 = vmatpush2.bf16.msra.mxu0 0
    %786 = vmatprep.subr.bf16.mxu0 0
    %787 = vmatpush2.bf16.msra.mxu0 0
    %788 = vmatprep.subr.bf16.mxu0 0
    %789 = vmatpush2.bf16.msra.mxu0 0
    %790 = vmatprep.subr.bf16.mxu0 0
    %791 = vmatpush2.bf16.msra.mxu0 0
    %792 = vmatprep.subr.bf16.mxu0 0
    %793 = vmatpush2.bf16.msra.mxu0 0
    %794 = vmatprep.subr.bf16.mxu0 0
    %795 = vmatpush2.bf16.msra.mxu0 0
    %796 = vmatprep.mubr.bf16.mxu0 0
    %797 = vmatmul.mubr.bf16.gmra.mxu0 %v94
    %v798 = vpop.f32.mrf.mxu0
    %v799 = vadd.f32 0.0, %v798
    %v800 = vpop.f32.mrf.mxu0
    %v801 = vpop.f32.mrf.mxu0
    %v802 = vadd.f32 0.0, %v801
    %v803 = vpop.f32.mrf.mxu0
    %804 = vdwg.mxu0
    %805 = vset.pattern.permute.xlu0 0
    %806 = vperm.xlu0 %805, %v527
    %v807 = vpop.permute.xlu0 %806
    %809 = vset.pattern.permute.xlu0 0
    %810 = vperm.xlu0 %809, %v528
    %v811 = vpop.permute.xlu0 %810
    %v813 = vmul.f32 %v807, %v799
    %v814 = vmul.f32 %v811, %v802
    %v815 = vpack.c.bf16 %v814, %v813
    %v816 = vld [vmem:[%s11] sm:$0xf]
    %v817 = vld [vmem:[%s11 + $0x4] sm:$0xf]
    %v818 = vld [vmem:[%s11 + $0x8] sm:$0xf]
    %v819 = vld [vmem:[%s11 + $0xc] sm:$0xf]
    %v820 = vld [vmem:[%s12] sm:$0xf]
    %v821 = vld [vmem:[%s12 + $0x4] sm:$0xf]
    %v822 = vld [vmem:[%s12 + $0x8] sm:$0xf]
    %v823 = vld [vmem:[%s12 + $0xc] sm:$0xf]
    %v828 = vunpack.c.l.b16 %v820
    %v829 = vunpack.c.l.b16 %v821
    %v830 = vunpack.c.l.b16 %v822
    %v831 = vunpack.c.l.b16 %v823
    %v832 = vpack.c.b16 %v829, %v828
    %v833 = vpack.c.b16 %v831, %v830
    %v837 = vsel %vm251, %v763, 0
    %839 = vmatprep.subr.bf16.mxu0 0
    %840 = vmatpush1.bf16.msra.mxu0 0
    %841 = vmatprep.subr.bf16.mxu0 0
    %842 = vmatpush1.bf16.msra.mxu0 0
    %843 = vmatprep.subr.bf16.mxu0 0
    %844 = vmatpush1.bf16.msra.mxu0 0
    %845 = vmatprep.subr.bf16.mxu0 0
    %846 = vmatpush1.bf16.msra.mxu0 0
    %847 = vmatprep.subr.bf16.mxu0 0
    %848 = vmatpush1.bf16.msra.mxu0 0
    %849 = vmatprep.subr.bf16.mxu0 0
    %850 = vmatpush1.bf16.msra.mxu0 0
    %851 = vmatprep.subr.bf16.mxu0 0
    %852 = vmatpush1.bf16.msra.mxu0 %v833
    %853 = vmatprep.subr.bf16.mxu0 0
    %854 = vmatpush1.bf16.msra.mxu0 %v832
    %855 = vmatprep.subr.bf16.mxu0 0
    %856 = vmatpush2.bf16.msra.mxu0 0
    %857 = vmatprep.subr.bf16.mxu0 0
    %858 = vmatpush2.bf16.msra.mxu0 0
    %859 = vmatprep.subr.bf16.mxu0 0
    %860 = vmatpush2.bf16.msra.mxu0 0
    %861 = vmatprep.subr.bf16.mxu0 0
    %862 = vmatpush2.bf16.msra.mxu0 0
    %863 = vmatprep.subr.bf16.mxu0 0
    %864 = vmatpush2.bf16.msra.mxu0 0
    %865 = vmatprep.subr.bf16.mxu0 0
    %866 = vmatpush2.bf16.msra.mxu0 0
    %867 = vmatprep.subr.bf16.mxu0 0
    %868 = vmatpush2.bf16.msra.mxu0 0
    %869 = vmatprep.subr.bf16.mxu0 0
    %870 = vmatpush2.bf16.msra.mxu0 0
    %871 = vmatprep.mubr.bf16.mxu0 0
    %872 = vmatmul.mubr.bf16.gmra.mxu0 %v837
    %v873 = vpop.f32.mrf.mxu0
    %v874 = vadd.f32 0.0, %v873
    %v875 = vpop.f32.mrf.mxu0
    %v876 = vpop.f32.mrf.mxu0
    %v877 = vadd.f32 0.0, %v876
    %v878 = vpop.f32.mrf.mxu0
    %879 = vdwg.mxu0
    %v884 = vunpack.c.l.b16 %v816
    %v885 = vunpack.c.l.b16 %v817
    %v886 = vunpack.c.l.b16 %v818
    %v887 = vunpack.c.l.b16 %v819
    %v888 = vpack.c.b16 %v885, %v884
    %v889 = vpack.c.b16 %v887, %v886
    %v893 = vsel %vm251, %v815, 0
    %895 = vmatprep.subr.bf16.mxu0 0
    %896 = vmatpush1.bf16.msra.mxu0 0
    %897 = vmatprep.subr.bf16.mxu0 0
    %898 = vmatpush1.bf16.msra.mxu0 0
    %899 = vmatprep.subr.bf16.mxu0 0
    %900 = vmatpush1.bf16.msra.mxu0 0
    %901 = vmatprep.subr.bf16.mxu0 0
    %902 = vmatpush1.bf16.msra.mxu0 0
    %903 = vmatprep.subr.bf16.mxu0 0
    %904 = vmatpush1.bf16.msra.mxu0 0
    %905 = vmatprep.subr.bf16.mxu0 0
    %906 = vmatpush1.bf16.msra.mxu0 0
    %907 = vmatprep.subr.bf16.mxu0 0
    %908 = vmatpush1.bf16.msra.mxu0 %v889
    %909 = vmatprep.subr.bf16.mxu0 0
    %910 = vmatpush1.bf16.msra.mxu0 %v888
    %911 = vmatprep.subr.bf16.mxu0 0
    %912 = vmatpush2.bf16.msra.mxu0 0
    %913 = vmatprep.subr.bf16.mxu0 0
    %914 = vmatpush2.bf16.msra.mxu0 0
    %915 = vmatprep.subr.bf16.mxu0 0
    %916 = vmatpush2.bf16.msra.mxu0 0
    %917 = vmatprep.subr.bf16.mxu0 0
    %918 = vmatpush2.bf16.msra.mxu0 0
    %919 = vmatprep.subr.bf16.mxu0 0
    %920 = vmatpush2.bf16.msra.mxu0 0
    %921 = vmatprep.subr.bf16.mxu0 0
    %922 = vmatpush2.bf16.msra.mxu0 0
    %923 = vmatprep.subr.bf16.mxu0 0
    %924 = vmatpush2.bf16.msra.mxu0 0
    %925 = vmatprep.subr.bf16.mxu0 0
    %926 = vmatpush2.bf16.msra.mxu0 0
    %927 = vmatprep.mubr.bf16.mxu0 0
    %928 = vmatmul.mubr.bf16.gmra.mxu0 %v893
    %v929 = vpop.f32.mrf.mxu0
    %v930 = vadd.f32 %v874, %v929
    %v931 = vpop.f32.mrf.mxu0
    %v932 = vpop.f32.mrf.mxu0
    %v933 = vadd.f32 %v877, %v932
    %v934 = vpop.f32.mrf.mxu0
    %935 = vdwg.mxu0
    %v936 = vld [vmem:[%s13] sm:$0x1]
    %v938 = vlaneseq
    %v939 = vshrl.u32 %v938, 7
    %v940 = vsub.s32 0, %v939
    %v941 = vrot.slane %v936, %v940
    %v943 = vadd.f32 %v930, %v941
    %v944 = vadd.f32 %v933, %v941
    %v945 = vmax.f32 %v943, 0.0
    %v946 = vmax.f32 %v944, 0.0
    %v947 = vld [vmem:[%s14] sm:$0xff]
    %v948 = vld [vmem:[%s14 + $0x8] sm:$0xff]
    %v949 = vld [vmem:[%s14 + $0x10] sm:$0xff]
    %v950 = vld [vmem:[%s14 + $0x18] sm:$0xff]
    %v952 = vsel %vm251, %v945, 0
    %v955 = vsel %vm251, %v946, 0
    %957 = vmatprep.subr.mxu0 0.0
    %958 = vmatpush1.msra.mxu0 0.0
    %959 = vmatprep.subr.mxu0 0.0
    %960 = vmatpush1.msra.mxu0 0.0
    %961 = vmatprep.subr.mxu0 0.0
    %962 = vmatpush1.msra.mxu0 0.0
    %963 = vmatprep.subr.mxu0 0.0
    %964 = vmatpush1.msra.mxu0 0.0
    %965 = vmatprep.subr.mxu0 0.0
    %966 = vmatpush1.msra.mxu0 0.0
    %967 = vmatprep.subr.mxu0 0.0
    %968 = vmatpush1.msra.mxu0 0.0
    %969 = vmatprep.subr.mxu0 0.0
    %970 = vmatpush1.msra.mxu0 0.0
    %971 = vmatprep.subr.mxu0 0.0
    %972 = vmatpush1.msra.mxu0 0.0
    %973 = vmatprep.subr.mxu0 0.0
    %974 = vmatpush1.msra.mxu0 0.0
    %975 = vmatprep.subr.mxu0 0.0
    %976 = vmatpush1.msra.mxu0 0.0
    %977 = vmatprep.subr.mxu0 0.0
    %978 = vmatpush1.msra.mxu0 0.0
    %979 = vmatprep.subr.mxu0 0.0
    %980 = vmatpush1.msra.mxu0 0.0
    %981 = vmatprep.subr.mxu0 0.0
    %982 = vmatpush1.msra.mxu0 %v950
    %983 = vmatprep.subr.mxu0 0.0
    %984 = vmatpush1.msra.mxu0 %v949
    %985 = vmatprep.subr.mxu0 0.0
    %986 = vmatpush1.msra.mxu0 %v948
    %987 = vmatprep.subr.mxu0 0.0
    %988 = vmatpush1.msra.mxu0 %v947
    %989 = vmatprep.subr.mxu0 0.0
    %990 = vmatpush2.msra.mxu0 0.0
    %991 = vmatprep.subr.mxu0 0.0
    %992 = vmatpush2.msra.mxu0 0.0
    %993 = vmatprep.subr.mxu0 0.0
    %994 = vmatpush2.msra.mxu0 0.0
    %995 = vmatprep.subr.mxu0 0.0
    %996 = vmatpush2.msra.mxu0 0.0
    %997 = vmatprep.subr.mxu0 0.0
    %998 = vmatpush2.msra.mxu0 0.0
    %999 = vmatprep.subr.mxu0 0.0
    %1000 = vmatpush2.msra.mxu0 0.0
    %1001 = vmatprep.subr.mxu0 0.0
    %1002 = vmatpush2.msra.mxu0 0.0
    %1003 = vmatprep.subr.mxu0 0.0
    %1004 = vmatpush2.msra.mxu0 0.0
    %1005 = vmatprep.subr.mxu0 0.0
    %1006 = vmatpush2.msra.mxu0 0.0
    %1007 = vmatprep.subr.mxu0 0.0
    %1008 = vmatpush2.msra.mxu0 0.0
    %1009 = vmatprep.subr.mxu0 0.0
    %1010 = vmatpush2.msra.mxu0 0.0
    %1011 = vmatprep.subr.mxu0 0.0
    %1012 = vmatpush2.msra.mxu0 0.0
    %1013 = vmatprep.subr.mxu0 0.0
    %1014 = vmatpush2.msra.mxu0 0.0
    %1015 = vmatprep.subr.mxu0 0.0
    %1016 = vmatpush2.msra.mxu0 0.0
    %1017 = vmatprep.subr.mxu0 0.0
    %1018 = vmatpush2.msra.mxu0 0.0
    %1019 = vmatprep.subr.mxu0 0.0
    %1020 = vmatpush2.msra.mxu0 0.0
    %1021 = vmatprep.mubr.f32.mxu0 0.0
    %1022 = vmatmul.mubr.f32.gmra.mxu0 %v952
    %v1023 = vpop.f32.mrf.mxu0
    %v1024 = vadd.f32 0.0, %v1023
    %v1025 = vpop.f32.mrf.mxu0
    %1026 = vmatprep.mubr.f32.mxu0 0.0
    %1027 = vmatmul.mubr.f32.gmra.mxu0 %v955
    %v1028 = vpop.f32.mrf.mxu0
    %v1029 = vadd.f32 0.0, %v1028
    %v1030 = vpop.f32.mrf.mxu0
    %1031 = vdwg.mxu0
    %v1032 = vld [vmem:[%s15] sm:$0x1]
    %v1034 = vsel %vm251, %v1032, 0
    %1036 = vmatprep.subr.mxu0 0.0
    %1037 = vmatpush1.xpose.msra.mxu0 0.0
    %1038 = vmatprep.subr.mxu0 0.0
    %1039 = vmatpush1.xpose.msra.mxu0 0.0
    %1040 = vmatprep.subr.mxu0 0.0
    %1041 = vmatpush1.xpose.msra.mxu0 0.0
    %1042 = vmatprep.subr.mxu0 0.0
    %1043 = vmatpush1.xpose.msra.mxu0 0.0
    %1044 = vmatprep.subr.mxu0 0.0
    %1045 = vmatpush1.xpose.msra.mxu0 0.0
    %1046 = vmatprep.subr.mxu0 0.0
    %1047 = vmatpush1.xpose.msra.mxu0 0.0
    %1048 = vmatprep.subr.mxu0 0.0
    %1049 = vmatpush1.xpose.msra.mxu0 0.0
    %1050 = vmatprep.subr.mxu0 0.0
    %1051 = vmatpush1.xpose.msra.mxu0 0.0
    %1052 = vmatprep.subr.mxu0 0.0
    %1053 = vmatpush1.xpose.msra.mxu0 0.0
    %1054 = vmatprep.subr.mxu0 0.0
    %1055 = vmatpush1.xpose.msra.mxu0 0.0
    %1056 = vmatprep.subr.mxu0 0.0
    %1057 = vmatpush1.xpose.msra.mxu0 0.0
    %1058 = vmatprep.subr.mxu0 0.0
    %1059 = vmatpush1.xpose.msra.mxu0 0.0
    %1060 = vmatprep.subr.mxu0 0.0
    %1061 = vmatpush1.xpose.msra.mxu0 0.0
    %1062 = vmatprep.subr.mxu0 0.0
    %1063 = vmatpush1.xpose.msra.mxu0 0.0
    %1064 = vmatprep.subr.mxu0 0.0
    %1065 = vmatpush1.xpose.msra.mxu0 %v955
    %1066 = vmatprep.subr.mxu0 0.0
    %1067 = vmatpush1.xpose.msra.mxu0 %v952
    %1068 = vmatprep.subr.mxu0 0.0
    %1069 = vmatpush2.xpose.msra.mxu0 0.0
    %1070 = vmatprep.subr.mxu0 0.0
    %1071 = vmatpush2.xpose.msra.mxu0 0.0
    %1072 = vmatprep.subr.mxu0 0.0
    %1073 = vmatpush2.xpose.msra.mxu0 0.0
    %1074 = vmatprep.subr.mxu0 0.0
    %1075 = vmatpush2.xpose.msra.mxu0 0.0
    %1076 = vmatprep.subr.mxu0 0.0
    %1077 = vmatpush2.xpose.msra.mxu0 0.0
    %1078 = vmatprep.subr.mxu0 0.0
    %1079 = vmatpush2.xpose.msra.mxu0 0.0
    %1080 = vmatprep.subr.mxu0 0.0
    %1081 = vmatpush2.xpose.msra.mxu0 0.0
    %1082 = vmatprep.subr.mxu0 0.0
    %1083 = vmatpush2.xpose.msra.mxu0 0.0
    %1084 = vmatprep.subr.mxu0 0.0
    %1085 = vmatpush2.xpose.msra.mxu0 0.0
    %1086 = vmatprep.subr.mxu0 0.0
    %1087 = vmatpush2.xpose.msra.mxu0 0.0
    %1088 = vmatprep.subr.mxu0 0.0
    %1089 = vmatpush2.xpose.msra.mxu0 0.0
    %1090 = vmatprep.subr.mxu0 0.0
    %1091 = vmatpush2.xpose.msra.mxu0 0.0
    %1092 = vmatprep.subr.mxu0 0.0
    %1093 = vmatpush2.xpose.msra.mxu0 0.0
    %1094 = vmatprep.subr.mxu0 0.0
    %1095 = vmatpush2.xpose.msra.mxu0 0.0
    %1096 = vmatprep.subr.mxu0 0.0
    %1097 = vmatpush2.xpose.msra.mxu0 0.0
    %1098 = vmatprep.subr.mxu0 0.0
    %1099 = vmatpush2.xpose.msra.mxu0 0.0
    %1100 = vmatprep.mubr.f32.mxu0 0.0
    %1101 = vmatmul.mubr.f32.gmra.mxu0 %v1034
    %v1102 = vpop.f32.mrf.mxu0
    %v1103 = vadd.f32 0.0, %v1102
    %v1104 = vpop.f32.mrf.mxu0
    %1105 = vdwg.mxu0
    %v1106 = vmul.f32 %v75, %v807
    %v1107 = vmul.f32 %v76, %v811
    %v1109 = vsel %vm407, %v1106, 0
    %v1112 = vsel %vm407, %v1107, 0
    %1114 = vmatprep.subr.mxu0 0.0
    %1115 = vmatpush1.xpose.msra.mxu0 0.0
    %1116 = vmatprep.subr.mxu0 0.0
    %1117 = vmatpush1.xpose.msra.mxu0 0.0
    %1118 = vmatprep.subr.mxu0 0.0
    %1119 = vmatpush1.xpose.msra.mxu0 0.0
    %1120 = vmatprep.subr.mxu0 0.0
    %1121 = vmatpush1.xpose.msra.mxu0 0.0
    %1122 = vmatprep.subr.mxu0 0.0
    %1123 = vmatpush1.xpose.msra.mxu0 0.0
    %1124 = vmatprep.subr.mxu0 0.0
    %1125 = vmatpush1.xpose.msra.mxu0 0.0
    %1126 = vmatprep.subr.mxu0 0.0
    %1127 = vmatpush1.xpose.msra.mxu0 0.0
    %1128 = vmatprep.subr.mxu0 0.0
    %1129 = vmatpush1.xpose.msra.mxu0 0.0
    %1130 = vmatprep.subr.mxu0 0.0
    %1131 = vmatpush1.xpose.msra.mxu0 0.0
    %1132 = vmatprep.subr.mxu0 0.0
    %1133 = vmatpush1.xpose.msra.mxu0 0.0
    %1134 = vmatprep.subr.mxu0 0.0
    %1135 = vmatpush1.xpose.msra.mxu0 0.0
    %1136 = vmatprep.subr.mxu0 0.0
    %1137 = vmatpush1.xpose.msra.mxu0 0.0
    %1138 = vmatprep.subr.mxu0 0.0
    %1139 = vmatpush1.xpose.msra.mxu0 0.0
    %1140 = vmatprep.subr.mxu0 0.0
    %1141 = vmatpush1.xpose.msra.mxu0 0.0
    %1142 = vmatprep.subr.mxu0 0.0
    %1143 = vmatpush1.xpose.msra.mxu0 %v1112
    %1144 = vmatprep.subr.mxu0 0.0
    %1145 = vmatpush1.xpose.msra.mxu0 %v1109
    %1146 = vmatprep.subr.mxu0 0.0
    %1147 = vmatpush2.xpose.msra.mxu0 0.0
    %1148 = vmatprep.subr.mxu0 0.0
    %1149 = vmatpush2.xpose.msra.mxu0 0.0
    %1150 = vmatprep.subr.mxu0 0.0
    %1151 = vmatpush2.xpose.msra.mxu0 0.0
    %1152 = vmatprep.subr.mxu0 0.0
    %1153 = vmatpush2.xpose.msra.mxu0 0.0
    %1154 = vmatprep.subr.mxu0 0.0
    %1155 = vmatpush2.xpose.msra.mxu0 0.0
    %1156 = vmatprep.subr.mxu0 0.0
    %1157 = vmatpush2.xpose.msra.mxu0 0.0
    %1158 = vmatprep.subr.mxu0 0.0
    %1159 = vmatpush2.xpose.msra.mxu0 0.0
    %1160 = vmatprep.subr.mxu0 0.0
    %1161 = vmatpush2.xpose.msra.mxu0 0.0
    %1162 = vmatprep.subr.mxu0 0.0
    %1163 = vmatpush2.xpose.msra.mxu0 0.0
    %1164 = vmatprep.subr.mxu0 0.0
    %1165 = vmatpush2.xpose.msra.mxu0 0.0
    %1166 = vmatprep.subr.mxu0 0.0
    %1167 = vmatpush2.xpose.msra.mxu0 0.0
    %1168 = vmatprep.subr.mxu0 0.0
    %1169 = vmatpush2.xpose.msra.mxu0 0.0
    %1170 = vmatprep.subr.mxu0 0.0
    %1171 = vmatpush2.xpose.msra.mxu0 0.0
    %1172 = vmatprep.subr.mxu0 0.0
    %1173 = vmatpush2.xpose.msra.mxu0 0.0
    %1174 = vmatprep.subr.mxu0 0.0
    %1175 = vmatpush2.xpose.msra.mxu0 0.0
    %1176 = vmatprep.subr.mxu0 0.0
    %1177 = vmatpush2.xpose.msra.mxu0 0.0
    %1178 = vmatprep.mubr.f32.mxu0 0.0
    %1179 = vmatmul.mubr.f32.gmra.mxu0 %v409
    %v1180 = vpop.f32.mrf.mxu0
    %v1181 = vadd.f32 0.0, %v1180
    %v1182 = vpop.f32.mrf.mxu0
    %1183 = vmatprep.mubr.f32.mxu0 0.0
    %1184 = vmatmul.mubr.f32.gmra.mxu0 %v412
    %v1185 = vpop.f32.mrf.mxu0
    %v1186 = vadd.f32 0.0, %v1185
    %v1187 = vpop.f32.mrf.mxu0
    %1188 = vdwg.mxu0
    %v1189 = vlaneseq
    %v1190 = vshrl.u32 %v1189, 7
    %v1191 = vsub.s32 0, %v1190
    %v1192 = vrot.slane %v1103, %v1191
    %1194 = vset.pattern.permute.xlu0 0
    %1195 = vperm.xlu0 %1194, %v1024
    %v1196 = vpop.permute.xlu0 %1195
    %1199 = vset.pattern.permute.xlu0 0
    %1200 = vperm.xlu0 %1199, %v1029
    %v1201 = vpop.permute.xlu0 %1200
    %vm1203 = vcmp.gt.f32.partialorder %v1192, %v1196
    %vm1204 = vcmp.gt.f32.partialorder %v1192, %v1201
    %vm1205 = vcmp.eq.f32.partialorder %v1192, %v1196
    %vm1206 = vcmp.eq.f32.partialorder %v1192, %v1201
    %vm1207 = vmand %vm1205, %vm83
    %vm1208 = vmand %vm1206, %vm84
    %vm1209 = vmor %vm1203, %vm1207
    %vm1210 = vmor %vm1204, %vm1208
    %vm1211 = vmand %vm85, %vm1209
    %vm1212 = vmand %vm86, %vm1210
    %v1213 = vsel %vm1211, %v1181, 0.0
    %v1214 = vsel %vm1212, %v1186, 0.0
    %v1215 = vsel %vm92, %v1213, 0.0
    %1216 = vadd.xlane.f32.xlu0 %v1215
    %v1217 = vpop.xlane.xlu0 %1216
    %v1218 = vsel %vm92, %v1214, 0.0
    %1219 = vadd.xlane.f32.xlu0 %v1218
    %v1220 = vpop.xlane.xlu0 %1219
    %v1221 = vld [vmem:[%s5] sm:$0xff]
    %v1222 = vld [vmem:[%s5 + $0x8] sm:$0xff]
    %vm1223 = vcmp.lt.f32.partialorder %v1217, %v1221
    %vm1224 = vcmp.lt.f32.partialorder %v1220, %v1222
    %v1225 = vsel %vm1223, 1, 0
    %v1226 = vsel %vm1224, 1, 0
    %v1227 = vcvt.s32.f32 %v1225
    %v1228 = vcvt.s32.f32 %v1226
    %v1229 = vmul.f32 %v527, %v1227
    %v1230 = vmul.f32 %v528, %v1228
    %v1231 = vtanh.pop %v1024
    %v1232 = vtanh.pop %v1029
    %v1233 = vmul.f32 %v1231, %v1229
    %v1234 = vmul.f32 %v1232, %v1230
    %1236 = vset.pattern.permute.xlu0 0
    %1237 = vperm.xlu0 %1236, %v1233
    %v1238 = vpop.permute.xlu0 %1237
    %1241 = vset.pattern.permute.xlu0 0
    %1242 = vperm.xlu0 %1241, %v1234
    %v1243 = vpop.permute.xlu0 %1242
    %v1245 = vmul.f32 %v945, %v1238
    %v1246 = vmul.f32 %v946, %v1243
    %1247 = vmatprep.subr.mxu0 0.0
    %1248 = vmatpush1.msra.mxu0 0.0
    %1249 = vmatprep.subr.mxu0 0.0
    %1250 = vmatpush1.msra.mxu0 0.0
    %1251 = vmatprep.subr.mxu0 0.0
    %1252 = vmatpush1.msra.mxu0 0.0
    %1253 = vmatprep.subr.mxu0 0.0
    %1254 = vmatpush1.msra.mxu0 0.0
    %1255 = vmatprep.subr.mxu0 0.0
    %1256 = vmatpush1.msra.mxu0 0.0
    %1257 = vmatprep.subr.mxu0 0.0
    %1258 = vmatpush1.msra.mxu0 0.0
    %1259 = vmatprep.subr.mxu0 0.0
    %1260 = vmatpush1.msra.mxu0 0.0
    %1261 = vmatprep.subr.mxu0 0.0
    %1262 = vmatpush1.msra.mxu0 0.0
    %1263 = vmatprep.subr.mxu0 0.0
    %1264 = vmatpush1.msra.mxu0 0.0
    %1265 = vmatprep.subr.mxu0 0.0
    %1266 = vmatpush1.msra.mxu0 0.0
    %1267 = vmatprep.subr.mxu0 0.0
    %1268 = vmatpush1.msra.mxu0 0.0
    %1269 = vmatprep.subr.mxu0 0.0
    %1270 = vmatpush1.msra.mxu0 0.0
    %1271 = vmatprep.subr.mxu0 0.0
    %1272 = vmatpush1.msra.mxu0 0.0
    %1273 = vmatprep.subr.mxu0 0.0
    %1274 = vmatpush1.msra.mxu0 0.0
    %1275 = vmatprep.subr.mxu0 0.0
    %1276 = vmatpush1.msra.mxu0 %v1230
    %1277 = vmatprep.subr.mxu0 0.0
    %1278 = vmatpush1.msra.mxu0 %v1229
    %1279 = vmatprep.subr.mxu0 0.0
    %1280 = vmatpush2.msra.mxu0 0.0
    %1281 = vmatprep.subr.mxu0 0.0
    %1282 = vmatpush2.msra.mxu0 0.0
    %1283 = vmatprep.subr.mxu0 0.0
    %1284 = vmatpush2.msra.mxu0 0.0
    %1285 = vmatprep.subr.mxu0 0.0
    %1286 = vmatpush2.msra.mxu0 0.0
    %1287 = vmatprep.subr.mxu0 0.0
    %1288 = vmatpush2.msra.mxu0 0.0
    %1289 = vmatprep.subr.mxu0 0.0
    %1290 = vmatpush2.msra.mxu0 0.0
    %1291 = vmatprep.subr.mxu0 0.0
    %1292 = vmatpush2.msra.mxu0 0.0
    %1293 = vmatprep.subr.mxu0 0.0
    %1294 = vmatpush2.msra.mxu0 0.0
    %1295 = vmatprep.subr.mxu0 0.0
    %1296 = vmatpush2.msra.mxu0 0.0
    %1297 = vmatprep.subr.mxu0 0.0
    %1298 = vmatpush2.msra.mxu0 0.0
    %1299 = vmatprep.subr.mxu0 0.0
    %1300 = vmatpush2.msra.mxu0 0.0
    %1301 = vmatprep.subr.mxu0 0.0
    %1302 = vmatpush2.msra.mxu0 0.0
    %1303 = vmatprep.subr.mxu0 0.0
    %1304 = vmatpush2.msra.mxu0 0.0
    %1305 = vmatprep.subr.mxu0 0.0
    %1306 = vmatpush2.msra.mxu0 0.0
    %1307 = vmatprep.subr.mxu0 0.0
    %1308 = vmatpush2.msra.mxu0 0.0
    %1309 = vmatprep.subr.mxu0 0.0
    %1310 = vmatpush2.msra.mxu0 0.0
    %1311 = vmatprep.mubr.f32.mxu0 0.0
    %1312 = vmatmul.mubr.f32.gmra.mxu0 %v546
    %v1313 = vpop.f32.mrf.mxu0
    %v1314 = vadd.f32 0.0, %v1313
    %v1315 = vpop.f32.mrf.mxu0
    %1316 = vdwg.mxu0
    %1317 = vmatprep.subr.mxu0 0.0
    %1318 = vmatpush1.msra.mxu0 0.0
    %1319 = vmatprep.subr.mxu0 0.0
    %1320 = vmatpush1.msra.mxu0 0.0
    %1321 = vmatprep.subr.mxu0 0.0
    %1322 = vmatpush1.msra.mxu0 0.0
    %1323 = vmatprep.subr.mxu0 0.0
    %1324 = vmatpush1.msra.mxu0 0.0
    %1325 = vmatprep.subr.mxu0 0.0
    %1326 = vmatpush1.msra.mxu0 0.0
    %1327 = vmatprep.subr.mxu0 0.0
    %1328 = vmatpush1.msra.mxu0 0.0
    %1329 = vmatprep.subr.mxu0 0.0
    %1330 = vmatpush1.msra.mxu0 0.0
    %1331 = vmatprep.subr.mxu0 0.0
    %1332 = vmatpush1.msra.mxu0 0.0
    %1333 = vmatprep.subr.mxu0 0.0
    %1334 = vmatpush1.msra.mxu0 0.0
    %1335 = vmatprep.subr.mxu0 0.0
    %1336 = vmatpush1.msra.mxu0 0.0
    %1337 = vmatprep.subr.mxu0 0.0
    %1338 = vmatpush1.msra.mxu0 0.0
    %1339 = vmatprep.subr.mxu0 0.0
    %1340 = vmatpush1.msra.mxu0 0.0
    %1341 = vmatprep.subr.mxu0 0.0
    %1342 = vmatpush1.msra.mxu0 0.0
    %1343 = vmatprep.subr.mxu0 0.0
    %1344 = vmatpush1.msra.mxu0 0.0
    %1345 = vmatprep.subr.mxu0 0.0
    %1346 = vmatpush1.msra.mxu0 %v1246
    %1347 = vmatprep.subr.mxu0 0.0
    %1348 = vmatpush1.msra.mxu0 %v1245
    %1349 = vmatprep.subr.mxu0 0.0
    %1350 = vmatpush2.msra.mxu0 0.0
    %1351 = vmatprep.subr.mxu0 0.0
    %1352 = vmatpush2.msra.mxu0 0.0
    %1353 = vmatprep.subr.mxu0 0.0
    %1354 = vmatpush2.msra.mxu0 0.0
    %1355 = vmatprep.subr.mxu0 0.0
    %1356 = vmatpush2.msra.mxu0 0.0
    %1357 = vmatprep.subr.mxu0 0.0
    %1358 = vmatpush2.msra.mxu0 0.0
    %1359 = vmatprep.subr.mxu0 0.0
    %1360 = vmatpush2.msra.mxu0 0.0
    %1361 = vmatprep.subr.mxu0 0.0
    %1362 = vmatpush2.msra.mxu0 0.0
    %1363 = vmatprep.subr.mxu0 0.0
    %1364 = vmatpush2.msra.mxu0 0.0
    %1365 = vmatprep.subr.mxu0 0.0
    %1366 = vmatpush2.msra.mxu0 0.0
    %1367 = vmatprep.subr.mxu0 0.0
    %1368 = vmatpush2.msra.mxu0 0.0
    %1369 = vmatprep.subr.mxu0 0.0
    %1370 = vmatpush2.msra.mxu0 0.0
    %1371 = vmatprep.subr.mxu0 0.0
    %1372 = vmatpush2.msra.mxu0 0.0
    %1373 = vmatprep.subr.mxu0 0.0
    %1374 = vmatpush2.msra.mxu0 0.0
    %1375 = vmatprep.subr.mxu0 0.0
    %1376 = vmatpush2.msra.mxu0 0.0
    %1377 = vmatprep.subr.mxu0 0.0
    %1378 = vmatpush2.msra.mxu0 0.0
    %1379 = vmatprep.subr.mxu0 0.0
    %1380 = vmatpush2.msra.mxu0 0.0
    %1381 = vmatprep.mubr.f32.mxu0 0.0
    %1382 = vmatmul.mubr.f32.gmra.mxu0 %v546
    %v1383 = vpop.f32.mrf.mxu0
    %v1384 = vadd.f32 0.0, %v1383
    %v1385 = vpop.f32.mrf.mxu0
    %1386 = vdwg.mxu0
    %v1387 = vmax.f32 %v1314, 1.0
    %1389 = vset.pattern.permute.xlu0 0
    %1390 = vperm.xlu0 %1389, %v1387
    %v1391 = vpop.permute.xlu0 %1390
    %v1393 = vrcp.pop %v1391
    %v1394 = vmul.f32 %v1384, %v1393
    %v1395 = vmul.f32 %v75, %v1229
    %v1396 = vmul.f32 %v76, %v1230
    %vm1397 = vcmp.gt.f32.partialorder %v1395, 0.0
    %vm1398 = vcmp.gt.f32.partialorder %v1396, 0.0
    %v1399 = vsel %vm1397, 1, 0
    %v1400 = vsel %vm1398, 1, 0
    %1401 = vset.pattern.permute.xlu0 0
    %1402 = vperm.xlu0 %1401, %v1399
    %v1403 = vpop.permute.xlu0 %1402
    %1404 = vset.pattern.permute.xlu0 0
    %1405 = vperm.xlu0 %1404, %v1400
    %v1406 = vpop.permute.xlu0 %1405
    %vm1407 = vcmp.eq.s32.totalorder %v1403, 1
    %vm1408 = vcmp.eq.s32.totalorder %v1406, 1
    %v1409 = vsel %vm1407, %v1245, -3.4028235e+38
    %v1410 = vsel %vm1408, %v1246, -3.4028235e+38
    %v1411 = vsel %vm251, %v1409, -inf
    %v1412 = vsel %vm251, %v1410, -inf
    %v1413 = vmax.f32 %v1411, %v1412
    %v1414 = vrot.slane %v1413, 4
    %v1415 = vmax.f32 %v1413, %v1414
    %v1416 = vrot.slane %v1415, 2
    %v1417 = vmax.f32 %v1415, %v1416
    %v1418 = vrot.slane %v1417, 1
    %v1419 = vmax.f32 %v1417, %v1418
    %1422 = vrot.lane.b32.xlu0 %v1229, 1
    %v1423 = vpop.permute.xlu0 %1422
    %1424 = vrot.lane.b32.xlu0 %v1230, 1
    %v1425 = vpop.permute.xlu0 %1424
    %v1428 = vmul.f32 %v75, %v1423
    %v1429 = vmul.f32 %v76, %v1425
    %vm1430 = vcmp.gt.f32.partialorder %v1428, 0.0
    %vm1431 = vcmp.gt.f32.partialorder %v1429, 0.0
    %v1432 = vsel %vm1430, 1, 0
    %v1433 = vsel %vm1431, 1, 0
    %1434 = vset.pattern.permute.xlu0 1
    %1435 = vperm.xlu0 %1434, %v1432
    %v1436 = vpop.permute.xlu0 %1435
    %1437 = vset.pattern.permute.xlu0 1
    %1438 = vperm.xlu0 %1437, %v1433
    %v1439 = vpop.permute.xlu0 %1438
    %vm1440 = vcmp.eq.s32.totalorder %v1436, 1
    %vm1441 = vcmp.eq.s32.totalorder %v1439, 1
    %v1442 = vsel %vm1440, %v1245, -3.4028235e+38
    %v1443 = vsel %vm1441, %v1246, -3.4028235e+38
    %v1444 = vsel %vm251, %v1442, -inf
    %v1445 = vsel %vm251, %v1443, -inf
    %v1446 = vmax.f32 %v1444, %v1445
    %v1447 = vrot.slane %v1446, 4
    %v1448 = vmax.f32 %v1446, %v1447
    %v1449 = vrot.slane %v1448, 2
    %v1450 = vmax.f32 %v1448, %v1449
    %v1451 = vrot.slane %v1450, 1
    %v1452 = vmax.f32 %v1450, %v1451
    %vm1453 = vcmp.gt.f32.partialorder %v1314, 0.0
    %v1454 = vsel %vm755, %v1419, %v1452
    %v1455 = vsel %vm1453, 1, 0
    %1456 = vset.pattern.permute.xlu0 0
    %1457 = vperm.xlu0 %1456, %v1455
    %v1458 = vpop.permute.xlu0 %1457
    %vm1459 = vcmp.eq.s32.totalorder %v1458, 1
    %v1460 = vsel %vm1459, %v1454, 0.0
    %v1461 = vadd.f32 %v762, %v1460
    %v1462 = vpack.c.bf16 %v1461, %v1461
    %v1463 = vadd.f32 %v695, %v1394
    %v1464 = vpack.c.bf16 %v1463, %v1463
    %v1465 = vld [vmem:[%s16] sm:$0xf]
    %v1466 = vld [vmem:[%s16 + $0x4] sm:$0xf]
    %v1467 = vld [vmem:[%s16 + $0x8] sm:$0xf]
    %v1468 = vld [vmem:[%s16 + $0xc] sm:$0xf]
    %v1469 = vld [vmem:[%s17] sm:$0xf]
    %v1470 = vld [vmem:[%s17 + $0x4] sm:$0xf]
    %v1471 = vld [vmem:[%s17 + $0x8] sm:$0xf]
    %v1472 = vld [vmem:[%s17 + $0xc] sm:$0xf]
    %v1477 = vunpack.c.l.b16 %v1469
    %v1478 = vunpack.c.l.b16 %v1470
    %v1479 = vunpack.c.l.b16 %v1471
    %v1480 = vunpack.c.l.b16 %v1472
    %v1481 = vpack.c.b16 %v1478, %v1477
    %v1482 = vpack.c.b16 %v1480, %v1479
    %v1486 = vsel %vm251, %v1464, 0
    %1488 = vmatprep.subr.bf16.mxu0 0
    %1489 = vmatpush1.bf16.msra.mxu0 0
    %1490 = vmatprep.subr.bf16.mxu0 0
    %1491 = vmatpush1.bf16.msra.mxu0 0
    %1492 = vmatprep.subr.bf16.mxu0 0
    %1493 = vmatpush1.bf16.msra.mxu0 0
    %1494 = vmatprep.subr.bf16.mxu0 0
    %1495 = vmatpush1.bf16.msra.mxu0 0
    %1496 = vmatprep.subr.bf16.mxu0 0
    %1497 = vmatpush1.bf16.msra.mxu0 0
    %1498 = vmatprep.subr.bf16.mxu0 0
    %1499 = vmatpush1.bf16.msra.mxu0 0
    %1500 = vmatprep.subr.bf16.mxu0 0
    %1501 = vmatpush1.bf16.msra.mxu0 %v1482
    %1502 = vmatprep.subr.bf16.mxu0 0
    %1503 = vmatpush1.bf16.msra.mxu0 %v1481
    %1504 = vmatprep.subr.bf16.mxu0 0
    %1505 = vmatpush2.bf16.msra.mxu0 0
    %1506 = vmatprep.subr.bf16.mxu0 0
    %1507 = vmatpush2.bf16.msra.mxu0 0
    %1508 = vmatprep.subr.bf16.mxu0 0
    %1509 = vmatpush2.bf16.msra.mxu0 0
    %1510 = vmatprep.subr.bf16.mxu0 0
    %1511 = vmatpush2.bf16.msra.mxu0 0
    %1512 = vmatprep.subr.bf16.mxu0 0
    %1513 = vmatpush2.bf16.msra.mxu0 0
    %1514 = vmatprep.subr.bf16.mxu0 0
    %1515 = vmatpush2.bf16.msra.mxu0 0
    %1516 = vmatprep.subr.bf16.mxu0 0
    %1517 = vmatpush2.bf16.msra.mxu0 0
    %1518 = vmatprep.subr.bf16.mxu0 0
    %1519 = vmatpush2.bf16.msra.mxu0 0
    %1520 = vmatprep.mubr.bf16.mxu0 0
    %1521 = vmatmul.mubr.bf16.gmra.mxu0 %v1486
    %v1522 = vpop.f32.mrf.mxu0
    %v1523 = vadd.f32 0.0, %v1522
    %v1524 = vpop.f32.mrf.mxu0
    %v1525 = vpop.f32.mrf.mxu0
    %v1526 = vpop.f32.mrf.mxu0
    %1527 = vdwg.mxu0
    %v1532 = vunpack.c.l.b16 %v1465
    %v1533 = vunpack.c.l.b16 %v1466
    %v1534 = vunpack.c.l.b16 %v1467
    %v1535 = vunpack.c.l.b16 %v1468
    %v1536 = vpack.c.b16 %v1533, %v1532
    %v1537 = vpack.c.b16 %v1535, %v1534
    %v1541 = vsel %vm251, %v1462, 0
    %1543 = vmatprep.subr.bf16.mxu0 0
    %1544 = vmatpush1.bf16.msra.mxu0 0
    %1545 = vmatprep.subr.bf16.mxu0 0
    %1546 = vmatpush1.bf16.msra.mxu0 0
    %1547 = vmatprep.subr.bf16.mxu0 0
    %1548 = vmatpush1.bf16.msra.mxu0 0
    %1549 = vmatprep.subr.bf16.mxu0 0
    %1550 = vmatpush1.bf16.msra.mxu0 0
    %1551 = vmatprep.subr.bf16.mxu0 0
    %1552 = vmatpush1.bf16.msra.mxu0 0
    %1553 = vmatprep.subr.bf16.mxu0 0
    %1554 = vmatpush1.bf16.msra.mxu0 0
    %1555 = vmatprep.subr.bf16.mxu0 0
    %1556 = vmatpush1.bf16.msra.mxu0 %v1537
    %1557 = vmatprep.subr.bf16.mxu0 0
    %1558 = vmatpush1.bf16.msra.mxu0 %v1536
    %1559 = vmatprep.subr.bf16.mxu0 0
    %1560 = vmatpush2.bf16.msra.mxu0 0
    %1561 = vmatprep.subr.bf16.mxu0 0
    %1562 = vmatpush2.bf16.msra.mxu0 0
    %1563 = vmatprep.subr.bf16.mxu0 0
    %1564 = vmatpush2.bf16.msra.mxu0 0
    %1565 = vmatprep.subr.bf16.mxu0 0
    %1566 = vmatpush2.bf16.msra.mxu0 0
    %1567 = vmatprep.subr.bf16.mxu0 0
    %1568 = vmatpush2.bf16.msra.mxu0 0
    %1569 = vmatprep.subr.bf16.mxu0 0
    %1570 = vmatpush2.bf16.msra.mxu0 0
    %1571 = vmatprep.subr.bf16.mxu0 0
    %1572 = vmatpush2.bf16.msra.mxu0 0
    %1573 = vmatprep.subr.bf16.mxu0 0
    %1574 = vmatpush2.bf16.msra.mxu0 0
    %1575 = vmatprep.mubr.bf16.mxu0 0
    %1576 = vmatmul.mubr.bf16.gmra.mxu0 %v1541
    %v1577 = vpop.f32.mrf.mxu0
    %v1578 = vadd.f32 %v1523, %v1577
    %v1579 = vpop.f32.mrf.mxu0
    %v1580 = vpop.f32.mrf.mxu0
    %v1581 = vpop.f32.mrf.mxu0
    %1582 = vdwg.mxu0
    %v1583 = vld [vmem:[%s18] sm:$0x1]
    %v1585 = vlaneseq
    %v1586 = vshrl.u32 %v1585, 7
    %v1587 = vsub.s32 0, %v1586
    %v1588 = vrot.slane %v1583, %v1587
    %v1590 = vadd.f32 %v1578, %v1588
    %v1591 = vmax.f32 %v1590, 0.0
    %v1592 = vpack.c.bf16 %v1591, %v1591
    %v1593 = vld [vmem:[%s19] sm:$0xf]
    %v1594 = vld [vmem:[%s19 + $0x4] sm:$0xf]
    %v1595 = vld [vmem:[%s19 + $0x8] sm:$0xf]
    %v1596 = vld [vmem:[%s19 + $0xc] sm:$0xf]
    %v1597 = vld [vmem:[%s20] sm:$0x1]
    %v1599 = vlaneseq
    %v1600 = vshrl.u32 %v1599, 7
    %v1601 = vsub.s32 0, %v1600
    %v1602 = vrot.slane %v1597, %v1601
    %v1608 = vunpack.c.l.b16 %v1593
    %v1609 = vunpack.c.l.b16 %v1594
    %v1610 = vunpack.c.l.b16 %v1595
    %v1611 = vunpack.c.l.b16 %v1596
    %v1612 = vpack.c.b16 %v1609, %v1608
    %v1613 = vpack.c.b16 %v1611, %v1610
    %v1617 = vsel %vm251, %v1592, 0
    %1619 = vmatprep.subr.bf16.mxu0 0
    %1620 = vmatpush1.bf16.msra.mxu0 0
    %1621 = vmatprep.subr.bf16.mxu0 0
    %1622 = vmatpush1.bf16.msra.mxu0 0
    %1623 = vmatprep.subr.bf16.mxu0 0
    %1624 = vmatpush1.bf16.msra.mxu0 0
    %1625 = vmatprep.subr.bf16.mxu0 0
    %1626 = vmatpush1.bf16.msra.mxu0 0
    %1627 = vmatprep.subr.bf16.mxu0 0
    %1628 = vmatpush1.bf16.msra.mxu0 0
    %1629 = vmatprep.subr.bf16.mxu0 0
    %1630 = vmatpush1.bf16.msra.mxu0 0
    %1631 = vmatprep.subr.bf16.mxu0 0
    %1632 = vmatpush1.bf16.msra.mxu0 %v1613
    %1633 = vmatprep.subr.bf16.mxu0 0
    %1634 = vmatpush1.bf16.msra.mxu0 %v1612
    %1635 = vmatprep.subr.bf16.mxu0 0
    %1636 = vmatpush2.bf16.msra.mxu0 0
    %1637 = vmatprep.subr.bf16.mxu0 0
    %1638 = vmatpush2.bf16.msra.mxu0 0
    %1639 = vmatprep.subr.bf16.mxu0 0
    %1640 = vmatpush2.bf16.msra.mxu0 0
    %1641 = vmatprep.subr.bf16.mxu0 0
    %1642 = vmatpush2.bf16.msra.mxu0 0
    %1643 = vmatprep.subr.bf16.mxu0 0
    %1644 = vmatpush2.bf16.msra.mxu0 0
    %1645 = vmatprep.subr.bf16.mxu0 0
    %1646 = vmatpush2.bf16.msra.mxu0 0
    %1647 = vmatprep.subr.bf16.mxu0 0
    %1648 = vmatpush2.bf16.msra.mxu0 0
    %1649 = vmatprep.subr.bf16.mxu0 0
    %1650 = vmatpush2.bf16.msra.mxu0 0
    %1651 = vmatprep.mubr.bf16.mxu0 0
    %1652 = vmatmul.mubr.bf16.gmra.mxu0 %v1617
    %v1653 = vpop.f32.mrf.mxu0
    %v1654 = vadd.f32 %v1602, %v1653
    %v1655 = vpop.f32.mrf.mxu0
    %v1656 = vpop.f32.mrf.mxu0
    %v1657 = vpop.f32.mrf.mxu0
    %1658 = vdwg.mxu0
    %vm1659 = vcmask 25600
    %v1660 = vsel %vm1659, %v1654, -inf
    %1661 = vmax.xlane.f32.xlu0 %v1660
    %v1662 = vpop.xlane.xlu0 %1661
    %v1663 = vsub.f32 %v1654, %v1662
    %v1664 = vmul.f32 %v1663, 1.442695
    %v1665 = vpow.pop %v1664
    %v1666 = vsel %vm1659, %v1665, 0.0
    %1667 = vadd.xlane.f32.xlu0 %v1666
    %v1668 = vpop.xlane.xlu0 %1667
    %v1669 = vlog2.pop %v1668
    %v1670 = vmul.f32 %v1669, 0.6931472
    %v1671 = vsub.f32 %v1663, %v1670
    %1672 = vst.msk [vmem:[#allocation2] sm:$0x3] %vm1659, %v1671
    // Predicated region
    $region86: #{net_forward.1} parent=1 // pred_check
      _
    $region87: #{net_forward.1} parent=1 // pred_check_branch
      %1674 = sbr.rel (0) target = $region89
    $region88: #{net_forward.1} parent=1 // pred_region
      %s1676 = ssub.s32 32, 32
      %1677 = vsyncadd [#allocation3], %s1676
      %s1679 = sshll.u32 [#allocation2], 4
      %s1680 = int_to_ptr.vmem [resolvable:$true] %s1679
      %1682 = dma.vmem_to_hbm [thread:$0]  %s1680, 32, %s21, [#allocation3]
    $region89: #{net_forward.1} parent=1 // pred_fallthru
      _
    // Predicated region
    $region90: #{net_forward.1} parent=1 // pred_check
      _
    $region91: #{net_forward.1} parent=1 // pred_check_branch
      %1684 = sbr.rel (0) target = $region93
    $region92: #{net_forward.1} parent=1 // pred_region
      %1685 = dma.done [#allocation3], 32
    $region93: #{net_forward.1} parent=1 // pred_fallthru
      _
    %1686 = vsyncpa [#allocation3], 1

</llo_original>
